<compile_context>
chip_gen: v6e
topology: v6e:2x2x1
jax: 0.10.0
libtpu: 0.0.40
codegen_flags: <defaults>
</compile_context>

<pallas_src>
import math

import jax
import jax.numpy as jnp
from jax.experimental import pallas as pl
from jax.experimental.pallas import tpu as pltpu

# ----------------------- small synthetic configuration -----------------------
B = 2                 # batch size
IMG_C = 3             # RGB input channels (samples.tensor is [B, 3, H, W])
IMG_H = IMG_W = 16    # input image spatial size
BB_C = 4              # backbone.num_channels
FH = FW = 8           # backbone feature-map spatial size (after stride-2 pool)
HW = FH * FW
D = 32                # transformer.d_model == hidden_dim
NUM_CLASSES = 5       # -> class_embed output dim = NUM_CLASSES + 1
NC = NUM_CLASSES + 1
NUM_QUERIES = 8       # num object queries
DEC_LAYERS = 2        # decoder layers -> leading dim of hs
M = DEC_LAYERS * B * NUM_QUERIES   # flattened hs rows


# ------------------------------ fused Pallas kernel ---------------------------
def _detr_fused_kernel(
    x_ref,        # (B*HW, IMG_C)  pooled NHWC pixels
    wproj_ref,    # (IMG_C, D)     folded backbone-proj @ input_proj weight
    bproj_ref,    # (1, D)         folded bias
    pos_ref,      # (B*HW, D)      sine positional embedding (flattened NHWC)
    bias_ref,     # (B*Q, HW)      additive attention mask bias per batch
    qe_ref,       # (Q, D)         query_embed.weight
    wq_ref,       # (D, L*D)       per-decoder-layer query projections, stacked
    wh1_ref,      # (D, NC + D)    [class_embed.W | bbox_embed.layer1.W]
    bh1_ref,      # (1, NC + D)
    w2_ref, b2_ref,   # (D, D), (1, D)   bbox_embed layer 2
    w3_ref, b3_ref,   # (D, 4), (1, 4)   bbox_embed layer 3
    logits_ref,   # (L*B*Q, NC)
    boxes_ref,    # (L*B*Q, 4)
    hs_sc,        # VMEM scratch (L*B*Q, D) -- hs never goes back to HBM
):
    # ---- input_proj (1x1 conv, backbone projection folded in) ----
    mem = (jnp.dot(x_ref[...], wproj_ref[...], preferred_element_type=jnp.float32)
           + bproj_ref[...])                                     # (B*HW, D)
    pos = pos_ref[...]                                           # (B*HW, D)
    bias = bias_ref[...]                                         # (B*Q, HW)

    # ---- project queries for ALL decoder layers in one MXU call ----
    q_all = jnp.dot(qe_ref[...], wq_ref[...],
                    preferred_element_type=jnp.float32)          # (Q, L*D)
    scale = 1.0 / math.sqrt(D)

    # ---- decoder cross-attention stub, (l, b) grid collapsed & unrolled ----
    for l in range(DEC_LAYERS):
        q_l = q_all[:, l * D:(l + 1) * D]                        # (Q, D)
        for b in range(B):
            mem_b = mem[b * HW:(b + 1) * HW, :]                  # (HW, D)
            k_b = mem_b + pos[b * HW:(b + 1) * HW, :]            # (HW, D)
            bias_b = bias[b * NUM_QUERIES:(b + 1) * NUM_QUERIES, :]  # (Q, HW)
            # scores: contract last dims (no materialized transpose)
            s = jax.lax.dot_general(
                q_l, k_b, (((1,), (1,)), ((), ())),
                preferred_element_type=jnp.float32) * scale + bias_b
            s = s - jnp.max(s, axis=-1, keepdims=True)
            p = jnp.exp(s)
            p = p * pl.reciprocal(jnp.sum(p, axis=-1, keepdims=True), approx=True)
            out_lb = jnp.dot(p, mem_b, preferred_element_type=jnp.float32)  # (Q, D)
            row = (l * B + b) * NUM_QUERIES
            hs_sc[row:row + NUM_QUERIES, :] = out_lb

    hs = hs_sc[...]                                              # (L*B*Q, D)

    # ---- heads: class_embed and bbox_embed layer-1 share one matmul ----
    h1 = (jnp.dot(hs, wh1_ref[...], preferred_element_type=jnp.float32)
          + bh1_ref[...])                                        # (M, NC + D)
    logits_ref[...] = h1[:, :NC]                                 # class logits
    h = jnp.maximum(h1[:, NC:], 0.0)                             # relu(layer1)
    h = jnp.maximum(
        jnp.dot(h, w2_ref[...], preferred_element_type=jnp.float32) + b2_ref[...],
        0.0)
    h = jnp.dot(h, w3_ref[...], preferred_element_type=jnp.float32) + b3_ref[...]
    boxes_ref[...] = jax.nn.sigmoid(h)


def _full_spec(shape):
    return pl.BlockSpec(shape, lambda i: (0,) * len(shape))


def detr_fused_pallas(x_flat, w_comb, b_comb, pos_flat, bias_bq, query_embed,
                      wq_flat, wh1, bh1, w2, b2, w3, b3):
    return pl.pallas_call(
        _detr_fused_kernel,
        out_shape=(
            jax.ShapeDtypeStruct((M, NC), jnp.float32),
            jax.ShapeDtypeStruct((M, 4), jnp.float32),
        ),
        grid=(1,),
        in_specs=[
            _full_spec((B * HW, IMG_C)),
            _full_spec((IMG_C, D)), _full_spec((1, D)),
            _full_spec((B * HW, D)),
            _full_spec((B * NUM_QUERIES, HW)),
            _full_spec((NUM_QUERIES, D)),
            _full_spec((D, DEC_LAYERS * D)),
            _full_spec((D, NC + D)), _full_spec((1, NC + D)),
            _full_spec((D, D)), _full_spec((1, D)),
            _full_spec((D, 4)), _full_spec((1, 4)),
        ],
        out_specs=(_full_spec((M, NC)), _full_spec((M, 4))),
        scratch_shapes=[pltpu.VMEM((M, D), jnp.float32)],
        compiler_params=pltpu.CompilerParams(
            dimension_semantics=("arbitrary",)),
    )(x_flat, w_comb, b_comb, pos_flat, bias_bq, query_embed,
      wq_flat, wh1, bh1, w2, b2, w3, b3)


# --------------------------- plain-JAX glue / stubs ---------------------------
def sine_pos_embed(mask):
    """DETR-style sine positional embedding from a padding mask (B, H, W)."""
    not_mask = (~mask).astype(jnp.float32)
    y_embed = jnp.cumsum(not_mask, axis=1)
    x_embed = jnp.cumsum(not_mask, axis=2)
    num_pos_feats = D // 2
    dim_t = jnp.arange(num_pos_feats, dtype=jnp.float32)
    dim_t = 10000.0 ** (2.0 * jnp.floor(dim_t / 2.0) / num_pos_feats)
    pos_x = x_embed[:, :, :, None] / dim_t
    pos_y = y_embed[:, :, :, None] / dim_t
    pos_x = jnp.stack(
        (jnp.sin(pos_x[..., 0::2]), jnp.cos(pos_x[..., 1::2])), axis=4
    ).reshape(*pos_x.shape[:3], -1)
    pos_y = jnp.stack(
        (jnp.sin(pos_y[..., 0::2]), jnp.cos(pos_y[..., 1::2])), axis=4
    ).reshape(*pos_y.shape[:3], -1)
    pos = jnp.concatenate([pos_y, pos_x], axis=3)            # (B, H, W, D)
    return jnp.transpose(pos, (0, 3, 1, 2))                  # (B, D, H, W)


def detr_forward(params, samples_img, samples_mask):
    # TODO(synk): the real DETR backbone (ResNet) and the full encoder/decoder
    # transformer are external modules not defined in the reference file; the
    # backbone is a deterministic stub (2x2 avg pool + 1x1 projection + sine
    # pos embedding) and the transformer is a per-layer masked cross-attention
    # stub. Their affine projections are folded into the fused kernel.
    x = samples_img.reshape(B, IMG_C, FH, 2, FW, 2).mean(axis=(3, 5))  # (B,3,FH,FW)
    x_flat = jnp.transpose(x, (0, 2, 3, 1)).reshape(B * HW, IMG_C)     # NHWC flat
    mask = samples_mask[:, ::2, ::2]                                   # (B,FH,FW)
    pos = sine_pos_embed(mask)                                         # (B,D,FH,FW)
    pos_flat = jnp.transpose(pos, (0, 2, 3, 1)).reshape(B * HW, D)
    mask_bias = jnp.where(mask.reshape(B, HW), -1e9, 0.0).astype(jnp.float32)
    bias_bq = jnp.broadcast_to(
        mask_bias[:, None, :], (B, NUM_QUERIES, HW)).reshape(B * NUM_QUERIES, HW)

    # fold backbone-stub projection into input_proj (no nonlinearity between):
    #   src = x @ bb_w + bb_b ; proj = src @ proj_w + proj_b
    w_comb = params['bb_w'] @ params['proj_w']                          # (3, D)
    b_comb = params['bb_b'] @ params['proj_w'] + params['proj_b']       # (D,)

    # stack per-decoder-layer query projections into one (D, L*D) matrix
    wq_flat = jnp.transpose(params['dec_wq'], (1, 0, 2)).reshape(D, DEC_LAYERS * D)

    # fuse class_embed and bbox_embed layer-1 into one (D, NC+D) matmul
    wh1 = jnp.concatenate([params['cls_w'], params['mlp_w1']], axis=1)  # (D, NC+D)
    bh1 = jnp.concatenate([params['cls_b'], params['mlp_b1']], axis=0)  # (NC+D,)

    logits2d, boxes2d = detr_fused_pallas(
        x_flat, w_comb, b_comb.reshape(1, D), pos_flat, bias_bq,
        params['query_embed'], wq_flat,
        wh1, bh1.reshape(1, NC + D),
        params['mlp_w2'], params['mlp_b2'].reshape(1, D),
        params['mlp_w3'], params['mlp_b3'].reshape(1, 4))

    outputs_class = logits2d.reshape(DEC_LAYERS, B, NUM_QUERIES, NC)
    outputs_coord = boxes2d.reshape(DEC_LAYERS, B, NUM_QUERIES, 4)

    # aux_loss=False path
    return {'pred_logits': outputs_class[-1], 'pred_boxes': outputs_coord[-1]}


# ------------------------------ parameter init --------------------------------
def init_params(key):
    ks = jax.random.split(key, 8)

    def linear(k, fan_in, fan_out):
        # torch.nn.Linear default init: U(-1/sqrt(fan_in), 1/sqrt(fan_in))
        bound = 1.0 / math.sqrt(fan_in)
        kw, kb = jax.random.split(k)
        w = jax.random.uniform(kw, (fan_in, fan_out), jnp.float32, -bound, bound)
        b = jax.random.uniform(kb, (fan_out,), jnp.float32, -bound, bound)
        return w, b

    p = {}
    # backbone stub projection (external module -> deterministic synthetic)
    p['bb_w'] = jax.random.normal(ks[0], (IMG_C, BB_C), jnp.float32) * 0.1
    p['bb_b'] = jnp.zeros((BB_C,), jnp.float32)
    # input_proj = Conv2d(BB_C, D, 1) -> weight stored as (Cin, Cout)
    p['proj_w'], p['proj_b'] = linear(ks[1], BB_C, D)
    # query_embed = nn.Embedding(NUM_QUERIES, D) -> N(0, 1)
    p['query_embed'] = jax.random.normal(ks[2], (NUM_QUERIES, D), jnp.float32)
    # per-decoder-layer query projection for the transformer stub
    p['dec_wq'] = jax.random.normal(ks[3], (DEC_LAYERS, D, D), jnp.float32) / math.sqrt(D)
    # class_embed = Linear(D, NUM_CLASSES + 1)
    p['cls_w'], p['cls_b'] = linear(ks[4], D, NC)
    # bbox_embed = MLP(D, D, 4, num_layers=3)
    p['mlp_w1'], p['mlp_b1'] = linear(ks[5], D, D)
    p['mlp_w2'], p['mlp_b2'] = linear(ks[6], D, D)
    p['mlp_w3'], p['mlp_b3'] = linear(ks[7], D, 4)
    return p


# ------------------------------------ main ------------------------------------
if __name__ == "__main__":
    key = jax.random.PRNGKey(0)
    pkey, ikey = jax.random.split(key)
    params = init_params(pkey)

    samples_img = jax.random.normal(ikey, (B, IMG_C, IMG_H, IMG_W), jnp.float32)
    samples_mask = jnp.zeros((B, IMG_H, IMG_W), dtype=jnp.bool_)  # no padded pixels

    out = jax.jit(lambda img, m: detr_forward(params, img, m))(samples_img, samples_mask)
    out = jax.block_until_ready(out)

    assert out['pred_logits'].shape == (B, NUM_QUERIES, NC)
    assert out['pred_boxes'].shape == (B, NUM_QUERIES, 4)
    assert bool(jnp.all(jnp.isfinite(out['pred_logits'])))
    assert bool(jnp.all((out['pred_boxes'] >= 0.0) & (out['pred_boxes'] <= 1.0)))
    print("KERNEL_OK")
</pallas_src>

<mosaic_0001>
module attributes {stable_mosaic.version = 11 : i64} {
  func.func @_detr_fused_kernel(%arg0: i32, %arg1: memref<128x3xf32, #tpu.memory_space<vmem>>, %arg2: memref<3x32xf32, #tpu.memory_space<vmem>>, %arg3: memref<1x32xf32, #tpu.memory_space<vmem>>, %arg4: memref<128x32xf32, #tpu.memory_space<vmem>>, %arg5: memref<16x64xf32, #tpu.memory_space<vmem>>, %arg6: memref<8x32xf32, #tpu.memory_space<vmem>>, %arg7: memref<32x64xf32, #tpu.memory_space<vmem>>, %arg8: memref<32x38xf32, #tpu.memory_space<vmem>>, %arg9: memref<1x38xf32, #tpu.memory_space<vmem>>, %arg10: memref<32x32xf32, #tpu.memory_space<vmem>>, %arg11: memref<1x32xf32, #tpu.memory_space<vmem>>, %arg12: memref<32x4xf32, #tpu.memory_space<vmem>>, %arg13: memref<1x4xf32, #tpu.memory_space<vmem>>, %arg14: memref<32x6xf32, #tpu.memory_space<vmem>>, %arg15: memref<32x4xf32, #tpu.memory_space<vmem>>, %arg16: memref<32x32xf32, #tpu.memory_space<vmem>>) attributes {dimension_semantics = [#tpu.dimension_semantics<arbitrary>], iteration_bounds = array<i64: 1>, scalar_prefetch = 0 : i64, scratch_operands = 1 : i64, tpu.core_type = #tpu.core_type<tc>, window_params = [{pipeline_mode = #tpu.pipeline_mode<synchronous>, transform_indices = @transform_0, window_bounds = array<i64: 128, 3>}, {pipeline_mode = #tpu.pipeline_mode<synchronous>, transform_indices = @transform_1, window_bounds = array<i64: 3, 32>}, {pipeline_mode = #tpu.pipeline_mode<synchronous>, transform_indices = @transform_2, window_bounds = array<i64: 1, 32>}, {pipeline_mode = #tpu.pipeline_mode<synchronous>, transform_indices = @transform_3, window_bounds = array<i64: 128, 32>}, {pipeline_mode = #tpu.pipeline_mode<synchronous>, transform_indices = @transform_4, window_bounds = array<i64: 16, 64>}, {pipeline_mode = #tpu.pipeline_mode<synchronous>, transform_indices = @transform_5, window_bounds = array<i64: 8, 32>}, {pipeline_mode = #tpu.pipeline_mode<synchronous>, transform_indices = @transform_6, window_bounds = array<i64: 32, 64>}, {pipeline_mode = #tpu.pipeline_mode<synchronous>, transform_indices = @transform_7, window_bounds = array<i64: 32, 38>}, {pipeline_mode = #tpu.pipeline_mode<synchronous>, transform_indices = @transform_8, window_bounds = array<i64: 1, 38>}, {pipeline_mode = #tpu.pipeline_mode<synchronous>, transform_indices = @transform_9, window_bounds = array<i64: 32, 32>}, {pipeline_mode = #tpu.pipeline_mode<synchronous>, transform_indices = @transform_10, window_bounds = array<i64: 1, 32>}, {pipeline_mode = #tpu.pipeline_mode<synchronous>, transform_indices = @transform_11, window_bounds = array<i64: 32, 4>}, {pipeline_mode = #tpu.pipeline_mode<synchronous>, transform_indices = @transform_12, window_bounds = array<i64: 1, 4>}, {pipeline_mode = #tpu.pipeline_mode<synchronous>, transform_indices = @transform_13, window_bounds = array<i64: 32, 6>}, {pipeline_mode = #tpu.pipeline_mode<synchronous>, transform_indices = @transform_14, window_bounds = array<i64: 32, 4>}]} {
    %c0 = arith.constant 0 : index
    %c0_0 = arith.constant 0 : index
    %0 = vector.load %arg1[%c0, %c0_0] : memref<128x3xf32, #tpu.memory_space<vmem>>, vector<128x3xf32>
    %c0_1 = arith.constant 0 : index
    %c0_2 = arith.constant 0 : index
    %1 = vector.load %arg2[%c0_1, %c0_2] : memref<3x32xf32, #tpu.memory_space<vmem>>, vector<3x32xf32>
    %cst = arith.constant dense<0.000000e+00> : vector<128x32xf32>
    %2 = tpu.matmul %0, %1, %cst {dimension_numbers = #tpu.dot_dimension_numbers<[1], [0], [0], [1], [0, 0, 1, 1], [], []>} : vector<128x3xf32>, vector<3x32xf32>, vector<128x32xf32> -> vector<128x32xf32>
    %c0_3 = arith.constant 0 : index
    %c0_4 = arith.constant 0 : index
    %3 = vector.load %arg3[%c0_3, %c0_4] : memref<1x32xf32, #tpu.memory_space<vmem>>, vector<1x32xf32>
    %4 = vector.broadcast %3 : vector<1x32xf32> to vector<128x32xf32>
    %5 = arith.addf %2, %4 : vector<128x32xf32>
    %c0_5 = arith.constant 0 : index
    %c0_6 = arith.constant 0 : index
    %6 = vector.load %arg4[%c0_5, %c0_6] : memref<128x32xf32, #tpu.memory_space<vmem>>, vector<128x32xf32>
    %c0_7 = arith.constant 0 : index
    %c0_8 = arith.constant 0 : index
    %7 = vector.load %arg5[%c0_7, %c0_8] : memref<16x64xf32, #tpu.memory_space<vmem>>, vector<16x64xf32>
    %c0_9 = arith.constant 0 : index
    %c0_10 = arith.constant 0 : index
    %8 = vector.load %arg6[%c0_9, %c0_10] : memref<8x32xf32, #tpu.memory_space<vmem>>, vector<8x32xf32>
    %c0_11 = arith.constant 0 : index
    %c0_12 = arith.constant 0 : index
    %9 = vector.load %arg7[%c0_11, %c0_12] : memref<32x64xf32, #tpu.memory_space<vmem>>, vector<32x64xf32>
    %cst_13 = arith.constant dense<0.000000e+00> : vector<8x64xf32>
    %10 = tpu.matmul %8, %9, %cst_13 {dimension_numbers = #tpu.dot_dimension_numbers<[1], [0], [0], [1], [0, 0, 1, 1], [], []>} : vector<8x32xf32>, vector<32x64xf32>, vector<8x64xf32> -> vector<8x64xf32>
    %11 = vector.extract_strided_slice %10 {offsets = [0, 0], sizes = [8, 32], strides = [1, 1]} : vector<8x64xf32> to vector<8x32xf32>
    %12 = vector.extract_strided_slice %5 {offsets = [0, 0], sizes = [64, 32], strides = [1, 1]} : vector<128x32xf32> to vector<64x32xf32>
    %13 = vector.extract_strided_slice %6 {offsets = [0, 0], sizes = [64, 32], strides = [1, 1]} : vector<128x32xf32> to vector<64x32xf32>
    %14 = arith.addf %12, %13 : vector<64x32xf32>
    %15 = vector.extract_strided_slice %7 {offsets = [0, 0], sizes = [8, 64], strides = [1, 1]} : vector<16x64xf32> to vector<8x64xf32>
    %cst_14 = arith.constant dense<0.000000e+00> : vector<8x64xf32>
    %16 = tpu.matmul %11, %14, %cst_14 {dimension_numbers = #tpu.dot_dimension_numbers<[1], [1], [0], [0], [0, 0, 1, 0], [], []>} : vector<8x32xf32>, vector<64x32xf32>, vector<8x64xf32> -> vector<8x64xf32>
    %cst_15 = arith.constant 0.176776692 : f32
    %17 = vector.broadcast %cst_15 : f32 to vector<8x64xf32>
    %18 = arith.mulf %16, %17 : vector<8x64xf32>
    %19 = arith.addf %18, %15 : vector<8x64xf32>
    %cst_16 = arith.constant dense<0xFF800000> : vector<8xf32>
    %20 = vector.multi_reduction <maximumf>, %19, %cst_16 [1] : vector<8x64xf32> to vector<8xf32>
    %21 = vector.shape_cast %20 : vector<8xf32> to vector<8x1xf32>
    %22 = vector.broadcast %21 : vector<8x1xf32> to vector<8x64xf32>
    %23 = arith.subf %19, %22 : vector<8x64xf32>
    %24 = math.exp %23 : vector<8x64xf32>
    %cst_17 = arith.constant dense<0.000000e+00> : vector<8xf32>
    %25 = vector.multi_reduction <add>, %24, %cst_17 [1] : vector<8x64xf32> to vector<8xf32>
    %26 = vector.shape_cast %25 : vector<8xf32> to vector<8x1xf32>
    %27 = tpu.reciprocal %26 {approx = true} : vector<8x1xf32> -> vector<8x1xf32>
    %28 = vector.broadcast %27 : vector<8x1xf32> to vector<8x64xf32>
    %29 = arith.mulf %24, %28 : vector<8x64xf32>
    %cst_18 = arith.constant dense<0.000000e+00> : vector<8x32xf32>
    %30 = tpu.matmul %29, %12, %cst_18 {dimension_numbers = #tpu.dot_dimension_numbers<[1], [0], [0], [1], [0, 0, 1, 1], [], []>} : vector<8x64xf32>, vector<64x32xf32>, vector<8x32xf32> -> vector<8x32xf32>
    %c0_19 = arith.constant 0 : index
    %c0_20 = arith.constant 0 : index
    %31 = vector.load %arg16[%c0_19, %c0_20] : memref<32x32xf32, #tpu.memory_space<vmem>>, vector<8x32xf32>
    tpu.vector_store %arg16[%c0_19, %c0_20], %30 {strides = array<i32>} : memref<32x32xf32, #tpu.memory_space<vmem>>, vector<8x32xf32>,
    %32 = vector.extract_strided_slice %5 {offsets = [64, 0], sizes = [64, 32], strides = [1, 1]} : vector<128x32xf32> to vector<64x32xf32>
    %33 = vector.extract_strided_slice %6 {offsets = [64, 0], sizes = [64, 32], strides = [1, 1]} : vector<128x32xf32> to vector<64x32xf32>
    %34 = arith.addf %32, %33 : vector<64x32xf32>
    %35 = vector.extract_strided_slice %7 {offsets = [8, 0], sizes = [8, 64], strides = [1, 1]} : vector<16x64xf32> to vector<8x64xf32>
    %cst_21 = arith.constant dense<0.000000e+00> : vector<8x64xf32>
    %36 = tpu.matmul %11, %34, %cst_21 {dimension_numbers = #tpu.dot_dimension_numbers<[1], [1], [0], [0], [0, 0, 1, 0], [], []>} : vector<8x32xf32>, vector<64x32xf32>, vector<8x64xf32> -> vector<8x64xf32>
    %cst_22 = arith.constant 0.176776692 : f32
    %37 = vector.broadcast %cst_22 : f32 to vector<8x64xf32>
    %38 = arith.mulf %36, %37 : vector<8x64xf32>
    %39 = arith.addf %38, %35 : vector<8x64xf32>
    %cst_23 = arith.constant dense<0xFF800000> : vector<8xf32>
    %40 = vector.multi_reduction <maximumf>, %39, %cst_23 [1] : vector<8x64xf32> to vector<8xf32>
    %41 = vector.shape_cast %40 : vector<8xf32> to vector<8x1xf32>
    %42 = vector.broadcast %41 : vector<8x1xf32> to vector<8x64xf32>
    %43 = arith.subf %39, %42 : vector<8x64xf32>
    %44 = math.exp %43 : vector<8x64xf32>
    %cst_24 = arith.constant dense<0.000000e+00> : vector<8xf32>
    %45 = vector.multi_reduction <add>, %44, %cst_24 [1] : vector<8x64xf32> to vector<8xf32>
    %46 = vector.shape_cast %45 : vector<8xf32> to vector<8x1xf32>
    %47 = tpu.reciprocal %46 {approx = true} : vector<8x1xf32> -> vector<8x1xf32>
    %48 = vector.broadcast %47 : vector<8x1xf32> to vector<8x64xf32>
    %49 = arith.mulf %44, %48 : vector<8x64xf32>
    %cst_25 = arith.constant dense<0.000000e+00> : vector<8x32xf32>
    %50 = tpu.matmul %49, %32, %cst_25 {dimension_numbers = #tpu.dot_dimension_numbers<[1], [0], [0], [1], [0, 0, 1, 1], [], []>} : vector<8x64xf32>, vector<64x32xf32>, vector<8x32xf32> -> vector<8x32xf32>
    %c8 = arith.constant 8 : index
    %c0_26 = arith.constant 0 : index
    %51 = vector.load %arg16[%c8, %c0_26] : memref<32x32xf32, #tpu.memory_space<vmem>>, vector<8x32xf32>
    tpu.vector_store %arg16[%c8, %c0_26], %50 {strides = array<i32>} : memref<32x32xf32, #tpu.memory_space<vmem>>, vector<8x32xf32>,
    %52 = vector.extract_strided_slice %10 {offsets = [0, 32], sizes = [8, 32], strides = [1, 1]} : vector<8x64xf32> to vector<8x32xf32>
    %53 = vector.extract_strided_slice %5 {offsets = [0, 0], sizes = [64, 32], strides = [1, 1]} : vector<128x32xf32> to vector<64x32xf32>
    %54 = vector.extract_strided_slice %6 {offsets = [0, 0], sizes = [64, 32], strides = [1, 1]} : vector<128x32xf32> to vector<64x32xf32>
    %55 = arith.addf %53, %54 : vector<64x32xf32>
    %56 = vector.extract_strided_slice %7 {offsets = [0, 0], sizes = [8, 64], strides = [1, 1]} : vector<16x64xf32> to vector<8x64xf32>
    %cst_27 = arith.constant dense<0.000000e+00> : vector<8x64xf32>
    %57 = tpu.matmul %52, %55, %cst_27 {dimension_numbers = #tpu.dot_dimension_numbers<[1], [1], [0], [0], [0, 0, 1, 0], [], []>} : vector<8x32xf32>, vector<64x32xf32>, vector<8x64xf32> -> vector<8x64xf32>
    %cst_28 = arith.constant 0.176776692 : f32
    %58 = vector.broadcast %cst_28 : f32 to vector<8x64xf32>
    %59 = arith.mulf %57, %58 : vector<8x64xf32>
    %60 = arith.addf %59, %56 : vector<8x64xf32>
    %cst_29 = arith.constant dense<0xFF800000> : vector<8xf32>
    %61 = vector.multi_reduction <maximumf>, %60, %cst_29 [1] : vector<8x64xf32> to vector<8xf32>
    %62 = vector.shape_cast %61 : vector<8xf32> to vector<8x1xf32>
    %63 = vector.broadcast %62 : vector<8x1xf32> to vector<8x64xf32>
    %64 = arith.subf %60, %63 : vector<8x64xf32>
    %65 = math.exp %64 : vector<8x64xf32>
    %cst_30 = arith.constant dense<0.000000e+00> : vector<8xf32>
    %66 = vector.multi_reduction <add>, %65, %cst_30 [1] : vector<8x64xf32> to vector<8xf32>
    %67 = vector.shape_cast %66 : vector<8xf32> to vector<8x1xf32>
    %68 = tpu.reciprocal %67 {approx = true} : vector<8x1xf32> -> vector<8x1xf32>
    %69 = vector.broadcast %68 : vector<8x1xf32> to vector<8x64xf32>
    %70 = arith.mulf %65, %69 : vector<8x64xf32>
    %cst_31 = arith.constant dense<0.000000e+00> : vector<8x32xf32>
    %71 = tpu.matmul %70, %53, %cst_31 {dimension_numbers = #tpu.dot_dimension_numbers<[1], [0], [0], [1], [0, 0, 1, 1], [], []>} : vector<8x64xf32>, vector<64x32xf32>, vector<8x32xf32> -> vector<8x32xf32>
    %c16 = arith.constant 16 : index
    %c0_32 = arith.constant 0 : index
    %72 = vector.load %arg16[%c16, %c0_32] : memref<32x32xf32, #tpu.memory_space<vmem>>, vector<8x32xf32>
    tpu.vector_store %arg16[%c16, %c0_32], %71 {strides = array<i32>} : memref<32x32xf32, #tpu.memory_space<vmem>>, vector<8x32xf32>,
    %73 = vector.extract_strided_slice %5 {offsets = [64, 0], sizes = [64, 32], strides = [1, 1]} : vector<128x32xf32> to vector<64x32xf32>
    %74 = vector.extract_strided_slice %6 {offsets = [64, 0], sizes = [64, 32], strides = [1, 1]} : vector<128x32xf32> to vector<64x32xf32>
    %75 = arith.addf %73, %74 : vector<64x32xf32>
    %76 = vector.extract_strided_slice %7 {offsets = [8, 0], sizes = [8, 64], strides = [1, 1]} : vector<16x64xf32> to vector<8x64xf32>
    %cst_33 = arith.constant dense<0.000000e+00> : vector<8x64xf32>
    %77 = tpu.matmul %52, %75, %cst_33 {dimension_numbers = #tpu.dot_dimension_numbers<[1], [1], [0], [0], [0, 0, 1, 0], [], []>} : vector<8x32xf32>, vector<64x32xf32>, vector<8x64xf32> -> vector<8x64xf32>
    %cst_34 = arith.constant 0.176776692 : f32
    %78 = vector.broadcast %cst_34 : f32 to vector<8x64xf32>
    %79 = arith.mulf %77, %78 : vector<8x64xf32>
    %80 = arith.addf %79, %76 : vector<8x64xf32>
    %cst_35 = arith.constant dense<0xFF800000> : vector<8xf32>
    %81 = vector.multi_reduction <maximumf>, %80, %cst_35 [1] : vector<8x64xf32> to vector<8xf32>
    %82 = vector.shape_cast %81 : vector<8xf32> to vector<8x1xf32>
    %83 = vector.broadcast %82 : vector<8x1xf32> to vector<8x64xf32>
    %84 = arith.subf %80, %83 : vector<8x64xf32>
    %85 = math.exp %84 : vector<8x64xf32>
    %cst_36 = arith.constant dense<0.000000e+00> : vector<8xf32>
    %86 = vector.multi_reduction <add>, %85, %cst_36 [1] : vector<8x64xf32> to vector<8xf32>
    %87 = vector.shape_cast %86 : vector<8xf32> to vector<8x1xf32>
    %88 = tpu.reciprocal %87 {approx = true} : vector<8x1xf32> -> vector<8x1xf32>
    %89 = vector.broadcast %88 : vector<8x1xf32> to vector<8x64xf32>
    %90 = arith.mulf %85, %89 : vector<8x64xf32>
    %cst_37 = arith.constant dense<0.000000e+00> : vector<8x32xf32>
    %91 = tpu.matmul %90, %73, %cst_37 {dimension_numbers = #tpu.dot_dimension_numbers<[1], [0], [0], [1], [0, 0, 1, 1], [], []>} : vector<8x64xf32>, vector<64x32xf32>, vector<8x32xf32> -> vector<8x32xf32>
    %c24 = arith.constant 24 : index
    %c0_38 = arith.constant 0 : index
    %92 = vector.load %arg16[%c24, %c0_38] : memref<32x32xf32, #tpu.memory_space<vmem>>, vector<8x32xf32>
    tpu.vector_store %arg16[%c24, %c0_38], %91 {strides = array<i32>} : memref<32x32xf32, #tpu.memory_space<vmem>>, vector<8x32xf32>,
    %c0_39 = arith.constant 0 : index
    %c0_40 = arith.constant 0 : index
    %93 = vector.load %arg16[%c0_39, %c0_40] : memref<32x32xf32, #tpu.memory_space<vmem>>, vector<32x32xf32>
    %c0_41 = arith.constant 0 : index
    %c0_42 = arith.constant 0 : index
    %94 = vector.load %arg8[%c0_41, %c0_42] : memref<32x38xf32, #tpu.memory_space<vmem>>, vector<32x38xf32>
    %cst_43 = arith.constant dense<0.000000e+00> : vector<32x38xf32>
    %95 = tpu.matmul %93, %94, %cst_43 {dimension_numbers = #tpu.dot_dimension_numbers<[1], [0], [0], [1], [0, 0, 1, 1], [], []>} : vector<32x32xf32>, vector<32x38xf32>, vector<32x38xf32> -> vector<32x38xf32>
    %c0_44 = arith.constant 0 : index
    %c0_45 = arith.constant 0 : index
    %96 = vector.load %arg9[%c0_44, %c0_45] : memref<1x38xf32, #tpu.memory_space<vmem>>, vector<1x38xf32>
    %97 = vector.broadcast %96 : vector<1x38xf32> to vector<32x38xf32>
    %98 = arith.addf %95, %97 : vector<32x38xf32>
    %99 = vector.extract_strided_slice %98 {offsets = [0, 0], sizes = [32, 6], strides = [1, 1]} : vector<32x38xf32> to vector<32x6xf32>
    %c0_46 = arith.constant 0 : index
    %c0_47 = arith.constant 0 : index
    %100 = vector.load %arg14[%c0_46, %c0_47] : memref<32x6xf32, #tpu.memory_space<vmem>>, vector<32x6xf32>
    tpu.vector_store %arg14[%c0_46, %c0_47], %99 {strides = array<i32>} : memref<32x6xf32, #tpu.memory_space<vmem>>, vector<32x6xf32>,
    %101 = vector.extract_strided_slice %98 {offsets = [0, 6], sizes = [32, 32], strides = [1, 1]} : vector<32x38xf32> to vector<32x32xf32>
    %cst_48 = arith.constant 0.000000e+00 : f32
    %102 = vector.broadcast %cst_48 : f32 to vector<32x32xf32>
    %103 = arith.maximumf %101, %102 : vector<32x32xf32>
    %c0_49 = arith.constant 0 : index
    %c0_50 = arith.constant 0 : index
    %104 = vector.load %arg10[%c0_49, %c0_50] : memref<32x32xf32, #tpu.memory_space<vmem>>, vector<32x32xf32>
    %cst_51 = arith.constant dense<0.000000e+00> : vector<32x32xf32>
    %105 = tpu.matmul %103, %104, %cst_51 {dimension_numbers = #tpu.dot_dimension_numbers<[1], [0], [0], [1], [0, 0, 1, 1], [], []>} : vector<32x32xf32>, vector<32x32xf32>, vector<32x32xf32> -> vector<32x32xf32>
    %c0_52 = arith.constant 0 : index
    %c0_53 = arith.constant 0 : index
    %106 = vector.load %arg11[%c0_52, %c0_53] : memref<1x32xf32, #tpu.memory_space<vmem>>, vector<1x32xf32>
    %107 = vector.broadcast %106 : vector<1x32xf32> to vector<32x32xf32>
    %108 = arith.addf %105, %107 : vector<32x32xf32>
    %cst_54 = arith.constant 0.000000e+00 : f32
    %109 = vector.broadcast %cst_54 : f32 to vector<32x32xf32>
    %110 = arith.maximumf %108, %109 : vector<32x32xf32>
    %c0_55 = arith.constant 0 : index
    %c0_56 = arith.constant 0 : index
    %111 = vector.load %arg12[%c0_55, %c0_56] : memref<32x4xf32, #tpu.memory_space<vmem>>, vector<32x4xf32>
    %cst_57 = arith.constant dense<0.000000e+00> : vector<32x4xf32>
    %112 = tpu.matmul %110, %111, %cst_57 {dimension_numbers = #tpu.dot_dimension_numbers<[1], [0], [0], [1], [0, 0, 1, 1], [], []>} : vector<32x32xf32>, vector<32x4xf32>, vector<32x4xf32> -> vector<32x4xf32>
    %c0_58 = arith.constant 0 : index
    %c0_59 = arith.constant 0 : index
    %113 = vector.load %arg13[%c0_58, %c0_59] : memref<1x4xf32, #tpu.memory_space<vmem>>, vector<1x4xf32>
    %114 = vector.broadcast %113 : vector<1x4xf32> to vector<32x4xf32>
    %115 = arith.addf %112, %114 : vector<32x4xf32>
    %116 = arith.negf %115 : vector<32x4xf32>
    %117 = math.exp %116 : vector<32x4xf32>
    %cst_60 = arith.constant 1.000000e+00 : f32
    %118 = vector.broadcast %cst_60 : f32 to vector<32x4xf32>
    %119 = arith.addf %118, %117 : vector<32x4xf32>
    %120 = arith.divf %118, %119 : vector<32x4xf32>
    %c0_61 = arith.constant 0 : index
    %c0_62 = arith.constant 0 : index
    %121 = vector.load %arg15[%c0_61, %c0_62] : memref<32x4xf32, #tpu.memory_space<vmem>>, vector<32x4xf32>
    tpu.vector_store %arg15[%c0_61, %c0_62], %120 {strides = array<i32>} : memref<32x4xf32, #tpu.memory_space<vmem>>, vector<32x4xf32>,
    return
  }
  func.func @transform_0(%arg0: i32) -> (i32, i32) {
    %c0_i32 = arith.constant 0 : i32
    %c0_i32_0 = arith.constant 0 : i32
    %c0_i32_1 = arith.constant 0 : i32
    return %c0_i32, %c0_i32_0 : i32, i32
  }
  func.func @transform_1(%arg0: i32) -> (i32, i32) {
    %c0_i32 = arith.constant 0 : i32
    %c0_i32_0 = arith.constant 0 : i32
    %c0_i32_1 = arith.constant 0 : i32
    return %c0_i32, %c0_i32_0 : i32, i32
  }
  func.func @transform_2(%arg0: i32) -> (i32, i32) {
    %c0_i32 = arith.constant 0 : i32
    %c0_i32_0 = arith.constant 0 : i32
    %c0_i32_1 = arith.constant 0 : i32
    return %c0_i32, %c0_i32_0 : i32, i32
  }
  func.func @transform_3(%arg0: i32) -> (i32, i32) {
    %c0_i32 = arith.constant 0 : i32
    %c0_i32_0 = arith.constant 0 : i32
    %c0_i32_1 = arith.constant 0 : i32
    return %c0_i32, %c0_i32_0 : i32, i32
  }
  func.func @transform_4(%arg0: i32) -> (i32, i32) {
    %c0_i32 = arith.constant 0 : i32
    %c0_i32_0 = arith.constant 0 : i32
    %c0_i32_1 = arith.constant 0 : i32
    return %c0_i32, %c0_i32_0 : i32, i32
  }
  func.func @transform_5(%arg0: i32) -> (i32, i32) {
    %c0_i32 = arith.constant 0 : i32
    %c0_i32_0 = arith.constant 0 : i32
    %c0_i32_1 = arith.constant 0 : i32
    return %c0_i32, %c0_i32_0 : i32, i32
  }
  func.func @transform_6(%arg0: i32) -> (i32, i32) {
    %c0_i32 = arith.constant 0 : i32
    %c0_i32_0 = arith.constant 0 : i32
    %c0_i32_1 = arith.constant 0 : i32
    return %c0_i32, %c0_i32_0 : i32, i32
  }
  func.func @transform_7(%arg0: i32) -> (i32, i32) {
    %c0_i32 = arith.constant 0 : i32
    %c0_i32_0 = arith.constant 0 : i32
    %c0_i32_1 = arith.constant 0 : i32
    return %c0_i32, %c0_i32_0 : i32, i32
  }
  func.func @transform_8(%arg0: i32) -> (i32, i32) {
    %c0_i32 = arith.constant 0 : i32
    %c0_i32_0 = arith.constant 0 : i32
    %c0_i32_1 = arith.constant 0 : i32
    return %c0_i32, %c0_i32_0 : i32, i32
  }
  func.func @transform_9(%arg0: i32) -> (i32, i32) {
    %c0_i32 = arith.constant 0 : i32
    %c0_i32_0 = arith.constant 0 : i32
    %c0_i32_1 = arith.constant 0 : i32
    return %c0_i32, %c0_i32_0 : i32, i32
  }
  func.func @transform_10(%arg0: i32) -> (i32, i32) {
    %c0_i32 = arith.constant 0 : i32
    %c0_i32_0 = arith.constant 0 : i32
    %c0_i32_1 = arith.constant 0 : i32
    return %c0_i32, %c0_i32_0 : i32, i32
  }
  func.func @transform_11(%arg0: i32) -> (i32, i32) {
    %c0_i32 = arith.constant 0 : i32
    %c0_i32_0 = arith.constant 0 : i32
    %c0_i32_1 = arith.constant 0 : i32
    return %c0_i32, %c0_i32_0 : i32, i32
  }
  func.func @transform_12(%arg0: i32) -> (i32, i32) {
    %c0_i32 = arith.constant 0 : i32
    %c0_i32_0 = arith.constant 0 : i32
    %c0_i32_1 = arith.constant 0 : i32
    return %c0_i32, %c0_i32_0 : i32, i32
  }
  func.func @transform_13(%arg0: i32) -> (i32, i32) {
    %c0_i32 = arith.constant 0 : i32
    %c0_i32_0 = arith.constant 0 : i32
    %c0_i32_1 = arith.constant 0 : i32
    return %c0_i32, %c0_i32_0 : i32, i32
  }
  func.func @transform_14(%arg0: i32) -> (i32, i32) {
    %c0_i32 = arith.constant 0 : i32
    %c0_i32_0 = arith.constant 0 : i32
    %c0_i32_1 = arith.constant 0 : i32
    return %c0_i32, %c0_i32_0 : i32, i32
  }
}

</mosaic_0001>

<llo_original>
// kernel: _lambda_.1
$region0: #{_lambda_.1}
  #allocation0 [shape = 'u32[]', space=smem, size = 0x4, offset = 0x4, fixed_abs, tag = 'smem constant byte address 0x4 - core index']
  #allocation1 [shape = 'u32[144,128]{1,0:T(1,128)}', space=vmem, size = 0x12000, scoped, tag = 'internal scratch']
  #allocation2 [shape = 'f32[32,32]{1,0:T(8,128)}', space=vmem, size = 0x4000, scoped, tag = 'scratch operand']
  %s0 = inlined_call_operand.vmem [shape: f32[128,3], index: 0, kind: input, shape index: {}]
  %s1 = inlined_call_operand.vmem [shape: f32[3,32], index: 1, kind: input, shape index: {}]
  %s2 = inlined_call_operand.vmem [shape: f32[1,32], index: 2, kind: input, shape index: {}]
  %s3 = inlined_call_operand.vmem [shape: f32[128,32], index: 3, kind: input, shape index: {}]
  %s4 = inlined_call_operand.vmem [shape: f32[16,64], index: 4, kind: input, shape index: {}]
  %s5 = inlined_call_operand.vmem [shape: f32[8,32], index: 5, kind: input, shape index: {}]
  %s6 = inlined_call_operand.vmem [shape: f32[32,64], index: 6, kind: input, shape index: {}]
  %s7 = inlined_call_operand.vmem [shape: f32[32,38], index: 7, kind: input, shape index: {}]
  %s8 = inlined_call_operand.vmem [shape: f32[1,38], index: 8, kind: input, shape index: {}]
  %s9 = inlined_call_operand.vmem [shape: f32[32,32], index: 9, kind: input, shape index: {}]
  %s10 = inlined_call_operand.vmem [shape: f32[1,32], index: 10, kind: input, shape index: {}]
  %s11 = inlined_call_operand.vmem [shape: f32[32,4], index: 11, kind: input, shape index: {}]
  %s12 = inlined_call_operand.vmem [shape: f32[1,4], index: 12, kind: input, shape index: {}]
  %s13 = inlined_call_operand.vmem [shape: f32[32,6], index: 13, kind: output, shape index: {0}]
  %s14 = inlined_call_operand.vmem [shape: f32[32,4], index: 14, kind: output, shape index: {1}]
  %15 = xla_tuple %s13, %s14
  %s16 = sld [smem:[#allocation0]]
  $region70: #{_lambda_.1} parent=0
    _
  %s18 = ssub.s32 1, %s16
  %s19 = scalar_select 0, %s18, %s16
  // Predicated region
  $region2: #{_lambda_.1} parent=0 // pred_check
    _
  $region3: #{_lambda_.1} parent=0 // pred_check_branch
    %21 = sbr.rel (0) target = $region5
  $region4: #{_lambda_.1} parent=0 // pred_region
    _
  $region5: #{_lambda_.1} parent=0 // pred_fallthru
    _
  // Predicated region
  $region6: #{_lambda_.1} parent=0 // pred_check
    _
  $region7: #{_lambda_.1} parent=0 // pred_check_branch
    %23 = sbr.rel (0) target = $region9
  $region8: #{_lambda_.1} parent=0 // pred_region
    _
  $region9: #{_lambda_.1} parent=0 // pred_fallthru
    _
  // Predicated region
  $region10: #{_lambda_.1} parent=0 // pred_check
    _
  $region11: #{_lambda_.1} parent=0 // pred_check_branch
    %25 = sbr.rel (0) target = $region13
  $region12: #{_lambda_.1} parent=0 // pred_region
    _
  $region13: #{_lambda_.1} parent=0 // pred_fallthru
    _
  // Predicated region
  $region14: #{_lambda_.1} parent=0 // pred_check
    _
  $region15: #{_lambda_.1} parent=0 // pred_check_branch
    %27 = sbr.rel (0) target = $region17
  $region16: #{_lambda_.1} parent=0 // pred_region
    _
  $region17: #{_lambda_.1} parent=0 // pred_fallthru
    _
  // Predicated region
  $region18: #{_lambda_.1} parent=0 // pred_check
    _
  $region19: #{_lambda_.1} parent=0 // pred_check_branch
    %29 = sbr.rel (0) target = $region21
  $region20: #{_lambda_.1} parent=0 // pred_region
    _
  $region21: #{_lambda_.1} parent=0 // pred_fallthru
    _
  // Predicated region
  $region22: #{_lambda_.1} parent=0 // pred_check
    _
  $region23: #{_lambda_.1} parent=0 // pred_check_branch
    %31 = sbr.rel (0) target = $region25
  $region24: #{_lambda_.1} parent=0 // pred_region
    _
  $region25: #{_lambda_.1} parent=0 // pred_fallthru
    _
  // Predicated region
  $region26: #{_lambda_.1} parent=0 // pred_check
    _
  $region27: #{_lambda_.1} parent=0 // pred_check_branch
    %33 = sbr.rel (0) target = $region29
  $region28: #{_lambda_.1} parent=0 // pred_region
    _
  $region29: #{_lambda_.1} parent=0 // pred_fallthru
    _
  // Predicated region
  $region30: #{_lambda_.1} parent=0 // pred_check
    _
  $region31: #{_lambda_.1} parent=0 // pred_check_branch
    %35 = sbr.rel (0) target = $region33
  $region32: #{_lambda_.1} parent=0 // pred_region
    _
  $region33: #{_lambda_.1} parent=0 // pred_fallthru
    _
  // Predicated region
  $region34: #{_lambda_.1} parent=0 // pred_check
    _
  $region35: #{_lambda_.1} parent=0 // pred_check_branch
    %37 = sbr.rel (0) target = $region37
  $region36: #{_lambda_.1} parent=0 // pred_region
    _
  $region37: #{_lambda_.1} parent=0 // pred_fallthru
    _
  // Predicated region
  $region38: #{_lambda_.1} parent=0 // pred_check
    _
  $region39: #{_lambda_.1} parent=0 // pred_check_branch
    %39 = sbr.rel (0) target = $region41
  $region40: #{_lambda_.1} parent=0 // pred_region
    _
  $region41: #{_lambda_.1} parent=0 // pred_fallthru
    _
  // Predicated region
  $region42: #{_lambda_.1} parent=0 // pred_check
    _
  $region43: #{_lambda_.1} parent=0 // pred_check_branch
    %41 = sbr.rel (0) target = $region45
  $region44: #{_lambda_.1} parent=0 // pred_region
    _
  $region45: #{_lambda_.1} parent=0 // pred_fallthru
    _
  // Predicated region
  $region46: #{_lambda_.1} parent=0 // pred_check
    _
  $region47: #{_lambda_.1} parent=0 // pred_check_branch
    %43 = sbr.rel (0) target = $region49
  $region48: #{_lambda_.1} parent=0 // pred_region
    _
  $region49: #{_lambda_.1} parent=0 // pred_fallthru
    _
  // Predicated region
  $region50: #{_lambda_.1} parent=0 // pred_check
    _
  $region51: #{_lambda_.1} parent=0 // pred_check_branch
    %45 = sbr.rel (0) target = $region53
  $region52: #{_lambda_.1} parent=0 // pred_region
    _
  $region53: #{_lambda_.1} parent=0 // pred_fallthru
    _
  %v46 = vld [vmem:[%s0] sm:$0xff]
  %v47 = vld [vmem:[%s0 + $0x8] sm:$0xff]
  %v48 = vld [vmem:[%s0 + $0x10] sm:$0xff]
  %v49 = vld [vmem:[%s0 + $0x18] sm:$0xff]
  %v50 = vld [vmem:[%s0 + $0x20] sm:$0xff]
  %v51 = vld [vmem:[%s0 + $0x28] sm:$0xff]
  %v52 = vld [vmem:[%s0 + $0x30] sm:$0xff]
  %v53 = vld [vmem:[%s0 + $0x38] sm:$0xff]
  %v54 = vld [vmem:[%s0 + $0x40] sm:$0xff]
  %v55 = vld [vmem:[%s0 + $0x48] sm:$0xff]
  %v56 = vld [vmem:[%s0 + $0x50] sm:$0xff]
  %v57 = vld [vmem:[%s0 + $0x58] sm:$0xff]
  %v58 = vld [vmem:[%s0 + $0x60] sm:$0xff]
  %v59 = vld [vmem:[%s0 + $0x68] sm:$0xff]
  %v60 = vld [vmem:[%s0 + $0x70] sm:$0xff]
  %v61 = vld [vmem:[%s0 + $0x78] sm:$0xff]
  %v62 = vld [vmem:[%s1] sm:$0x7]
  %v63 = vld [vmem:[%s2] sm:$0x1]
  %v65 = vlaneseq
  %v66 = vshrl.u32 %v65, 7
  %v67 = vsub.s32 0, %v66
  %v68 = vrot.slane %v63, %v67
  %vm70 = vcmask 23552
  %v72 = vsel %vm70, %v46, 0
  %v75 = vsel %vm70, %v47, 0
  %v78 = vsel %vm70, %v48, 0
  %v81 = vsel %vm70, %v49, 0
  %v84 = vsel %vm70, %v50, 0
  %v87 = vsel %vm70, %v51, 0
  %v90 = vsel %vm70, %v52, 0
  %v93 = vsel %vm70, %v53, 0
  %v96 = vsel %vm70, %v54, 0
  %v99 = vsel %vm70, %v55, 0
  %v102 = vsel %vm70, %v56, 0
  %v105 = vsel %vm70, %v57, 0
  %v108 = vsel %vm70, %v58, 0
  %v111 = vsel %vm70, %v59, 0
  %v114 = vsel %vm70, %v60, 0
  %v117 = vsel %vm70, %v61, 0
  %vm119 = vcmask 1042432
  %v121 = vsel %vm119, %v62, 0
  %123 = vmatprep.subr.mxu0 0.0
  %124 = vmatpush1.msra.mxu0 0.0
  %125 = vmatprep.subr.mxu0 0.0
  %126 = vmatpush1.msra.mxu0 0.0
  %127 = vmatprep.subr.mxu0 0.0
  %128 = vmatpush1.msra.mxu0 0.0
  %129 = vmatprep.subr.mxu0 0.0
  %130 = vmatpush1.msra.mxu0 0.0
  %131 = vmatprep.subr.mxu0 0.0
  %132 = vmatpush1.msra.mxu0 0.0
  %133 = vmatprep.subr.mxu0 0.0
  %134 = vmatpush1.msra.mxu0 0.0
  %135 = vmatprep.subr.mxu0 0.0
  %136 = vmatpush1.msra.mxu0 0.0
  %137 = vmatprep.subr.mxu0 0.0
  %138 = vmatpush1.msra.mxu0 0.0
  %139 = vmatprep.subr.mxu0 0.0
  %140 = vmatpush1.msra.mxu0 0.0
  %141 = vmatprep.subr.mxu0 0.0
  %142 = vmatpush1.msra.mxu0 0.0
  %143 = vmatprep.subr.mxu0 0.0
  %144 = vmatpush1.msra.mxu0 0.0
  %145 = vmatprep.subr.mxu0 0.0
  %146 = vmatpush1.msra.mxu0 0.0
  %147 = vmatprep.subr.mxu0 0.0
  %148 = vmatpush1.msra.mxu0 0.0
  %149 = vmatprep.subr.mxu0 0.0
  %150 = vmatpush1.msra.mxu0 0.0
  %151 = vmatprep.subr.mxu0 0.0
  %152 = vmatpush1.msra.mxu0 0.0
  %153 = vmatprep.subr.mxu0 0.0
  %154 = vmatpush1.msra.mxu0 %v121
  %155 = vmatprep.subr.mxu0 0.0
  %156 = vmatpush2.msra.mxu0 0.0
  %157 = vmatprep.subr.mxu0 0.0
  %158 = vmatpush2.msra.mxu0 0.0
  %159 = vmatprep.subr.mxu0 0.0
  %160 = vmatpush2.msra.mxu0 0.0
  %161 = vmatprep.subr.mxu0 0.0
  %162 = vmatpush2.msra.mxu0 0.0
  %163 = vmatprep.subr.mxu0 0.0
  %164 = vmatpush2.msra.mxu0 0.0
  %165 = vmatprep.subr.mxu0 0.0
  %166 = vmatpush2.msra.mxu0 0.0
  %167 = vmatprep.subr.mxu0 0.0
  %168 = vmatpush2.msra.mxu0 0.0
  %169 = vmatprep.subr.mxu0 0.0
  %170 = vmatpush2.msra.mxu0 0.0
  %171 = vmatprep.subr.mxu0 0.0
  %172 = vmatpush2.msra.mxu0 0.0
  %173 = vmatprep.subr.mxu0 0.0
  %174 = vmatpush2.msra.mxu0 0.0
  %175 = vmatprep.subr.mxu0 0.0
  %176 = vmatpush2.msra.mxu0 0.0
  %177 = vmatprep.subr.mxu0 0.0
  %178 = vmatpush2.msra.mxu0 0.0
  %179 = vmatprep.subr.mxu0 0.0
  %180 = vmatpush2.msra.mxu0 0.0
  %181 = vmatprep.subr.mxu0 0.0
  %182 = vmatpush2.msra.mxu0 0.0
  %183 = vmatprep.subr.mxu0 0.0
  %184 = vmatpush2.msra.mxu0 0.0
  %185 = vmatprep.subr.mxu0 0.0
  %186 = vmatpush2.msra.mxu0 0.0
  %187 = vmatprep.mubr.f32.mxu0 0.0
  %188 = vmatmul.mubr.f32.gmra.mxu0 %v72
  %v189 = vpop.f32.mrf.mxu0
  %v190 = vadd.f32 %v68, %v189
  %v191 = vpop.f32.mrf.mxu0
  %192 = vmatprep.mubr.f32.mxu0 0.0
  %193 = vmatmul.mubr.f32.gmra.mxu0 %v75
  %v194 = vpop.f32.mrf.mxu0
  %v195 = vadd.f32 %v68, %v194
  %v196 = vpop.f32.mrf.mxu0
  %197 = vmatprep.mubr.f32.mxu0 0.0
  %198 = vmatmul.mubr.f32.gmra.mxu0 %v78
  %v199 = vpop.f32.mrf.mxu0
  %v200 = vadd.f32 %v68, %v199
  %v201 = vpop.f32.mrf.mxu0
  %202 = vmatprep.mubr.f32.mxu0 0.0
  %203 = vmatmul.mubr.f32.gmra.mxu0 %v81
  %v204 = vpop.f32.mrf.mxu0
  %v205 = vadd.f32 %v68, %v204
  %v206 = vpop.f32.mrf.mxu0
  %207 = vmatprep.mubr.f32.mxu0 0.0
  %208 = vmatmul.mubr.f32.gmra.mxu0 %v84
  %v209 = vpop.f32.mrf.mxu0
  %v210 = vadd.f32 %v68, %v209
  %v211 = vpop.f32.mrf.mxu0
  %212 = vmatprep.mubr.f32.mxu0 0.0
  %213 = vmatmul.mubr.f32.gmra.mxu0 %v87
  %v214 = vpop.f32.mrf.mxu0
  %v215 = vadd.f32 %v68, %v214
  %v216 = vpop.f32.mrf.mxu0
  %217 = vmatprep.mubr.f32.mxu0 0.0
  %218 = vmatmul.mubr.f32.gmra.mxu0 %v90
  %v219 = vpop.f32.mrf.mxu0
  %v220 = vadd.f32 %v68, %v219
  %v221 = vpop.f32.mrf.mxu0
  %222 = vmatprep.mubr.f32.mxu0 0.0
  %223 = vmatmul.mubr.f32.gmra.mxu0 %v93
  %v224 = vpop.f32.mrf.mxu0
  %v225 = vadd.f32 %v68, %v224
  %v226 = vpop.f32.mrf.mxu0
  %227 = vmatprep.mubr.f32.mxu0 0.0
  %228 = vmatmul.mubr.f32.gmra.mxu0 %v96
  %v229 = vpop.f32.mrf.mxu0
  %v230 = vadd.f32 %v68, %v229
  %v231 = vpop.f32.mrf.mxu0
  %232 = vmatprep.mubr.f32.mxu0 0.0
  %233 = vmatmul.mubr.f32.gmra.mxu0 %v99
  %v234 = vpop.f32.mrf.mxu0
  %v235 = vadd.f32 %v68, %v234
  %v236 = vpop.f32.mrf.mxu0
  %237 = vmatprep.mubr.f32.mxu0 0.0
  %238 = vmatmul.mubr.f32.gmra.mxu0 %v102
  %v239 = vpop.f32.mrf.mxu0
  %v240 = vadd.f32 %v68, %v239
  %v241 = vpop.f32.mrf.mxu0
  %242 = vmatprep.mubr.f32.mxu0 0.0
  %243 = vmatmul.mubr.f32.gmra.mxu0 %v105
  %v244 = vpop.f32.mrf.mxu0
  %v245 = vadd.f32 %v68, %v244
  %v246 = vpop.f32.mrf.mxu0
  %247 = vmatprep.mubr.f32.mxu0 0.0
  %248 = vmatmul.mubr.f32.gmra.mxu0 %v108
  %v249 = vpop.f32.mrf.mxu0
  %v250 = vadd.f32 %v68, %v249
  %v251 = vpop.f32.mrf.mxu0
  %252 = vmatprep.mubr.f32.mxu0 0.0
  %253 = vmatmul.mubr.f32.gmra.mxu0 %v111
  %v254 = vpop.f32.mrf.mxu0
  %v255 = vadd.f32 %v68, %v254
  %v256 = vpop.f32.mrf.mxu0
  %257 = vmatprep.mubr.f32.mxu0 0.0
  %258 = vmatmul.mubr.f32.gmra.mxu0 %v114
  %v259 = vpop.f32.mrf.mxu0
  %v260 = vadd.f32 %v68, %v259
  %v261 = vpop.f32.mrf.mxu0
  %262 = vmatprep.mubr.f32.mxu0 0.0
  %263 = vmatmul.mubr.f32.gmra.mxu0 %v117
  %v264 = vpop.f32.mrf.mxu0
  %v265 = vadd.f32 %v68, %v264
  %v266 = vpop.f32.mrf.mxu0
  %267 = vdwg.mxu0
  %v268 = vld [vmem:[%s3] sm:$0xff]
  %v269 = vld [vmem:[%s3 + $0x8] sm:$0xff]
  %v270 = vld [vmem:[%s3 + $0x10] sm:$0xff]
  %v271 = vld [vmem:[%s3 + $0x18] sm:$0xff]
  %v272 = vld [vmem:[%s3 + $0x20] sm:$0xff]
  %v273 = vld [vmem:[%s3 + $0x28] sm:$0xff]
  %v274 = vld [vmem:[%s3 + $0x30] sm:$0xff]
  %v275 = vld [vmem:[%s3 + $0x38] sm:$0xff]
  %v276 = vld [vmem:[%s3 + $0x40] sm:$0xff]
  %v277 = vld [vmem:[%s3 + $0x48] sm:$0xff]
  %v278 = vld [vmem:[%s3 + $0x50] sm:$0xff]
  %v279 = vld [vmem:[%s3 + $0x58] sm:$0xff]
  %v280 = vld [vmem:[%s3 + $0x60] sm:$0xff]
  %v281 = vld [vmem:[%s3 + $0x68] sm:$0xff]
  %v282 = vld [vmem:[%s3 + $0x70] sm:$0xff]
  %v283 = vld [vmem:[%s3 + $0x78] sm:$0xff]
  %v284 = vld [vmem:[%s4] sm:$0xff]
  %v285 = vld [vmem:[%s4 + $0x8] sm:$0xff]
  %v286 = vld [vmem:[%s5] sm:$0xff]
  %v287 = vld [vmem:[%s6] sm:$0xff]
  %v288 = vld [vmem:[%s6 + $0x8] sm:$0xff]
  %v289 = vld [vmem:[%s6 + $0x10] sm:$0xff]
  %v290 = vld [vmem:[%s6 + $0x18] sm:$0xff]
  %vm291 = vcmask 261120
  %v293 = vsel %vm291, %v286, 0
  %295 = vmatprep.subr.mxu0 0.0
  %296 = vmatpush1.msra.mxu0 0.0
  %297 = vmatprep.subr.mxu0 0.0
  %298 = vmatpush1.msra.mxu0 0.0
  %299 = vmatprep.subr.mxu0 0.0
  %300 = vmatpush1.msra.mxu0 0.0
  %301 = vmatprep.subr.mxu0 0.0
  %302 = vmatpush1.msra.mxu0 0.0
  %303 = vmatprep.subr.mxu0 0.0
  %304 = vmatpush1.msra.mxu0 0.0
  %305 = vmatprep.subr.mxu0 0.0
  %306 = vmatpush1.msra.mxu0 0.0
  %307 = vmatprep.subr.mxu0 0.0
  %308 = vmatpush1.msra.mxu0 0.0
  %309 = vmatprep.subr.mxu0 0.0
  %310 = vmatpush1.msra.mxu0 0.0
  %311 = vmatprep.subr.mxu0 0.0
  %312 = vmatpush1.msra.mxu0 0.0
  %313 = vmatprep.subr.mxu0 0.0
  %314 = vmatpush1.msra.mxu0 0.0
  %315 = vmatprep.subr.mxu0 0.0
  %316 = vmatpush1.msra.mxu0 0.0
  %317 = vmatprep.subr.mxu0 0.0
  %318 = vmatpush1.msra.mxu0 0.0
  %319 = vmatprep.subr.mxu0 0.0
  %320 = vmatpush1.msra.mxu0 %v290
  %321 = vmatprep.subr.mxu0 0.0
  %322 = vmatpush1.msra.mxu0 %v289
  %323 = vmatprep.subr.mxu0 0.0
  %324 = vmatpush1.msra.mxu0 %v288
  %325 = vmatprep.subr.mxu0 0.0
  %326 = vmatpush1.msra.mxu0 %v287
  %327 = vmatprep.subr.mxu0 0.0
  %328 = vmatpush2.msra.mxu0 0.0
  %329 = vmatprep.subr.mxu0 0.0
  %330 = vmatpush2.msra.mxu0 0.0
  %331 = vmatprep.subr.mxu0 0.0
  %332 = vmatpush2.msra.mxu0 0.0
  %333 = vmatprep.subr.mxu0 0.0
  %334 = vmatpush2.msra.mxu0 0.0
  %335 = vmatprep.subr.mxu0 0.0
  %336 = vmatpush2.msra.mxu0 0.0
  %337 = vmatprep.subr.mxu0 0.0
  %338 = vmatpush2.msra.mxu0 0.0
  %339 = vmatprep.subr.mxu0 0.0
  %340 = vmatpush2.msra.mxu0 0.0
  %341 = vmatprep.subr.mxu0 0.0
  %342 = vmatpush2.msra.mxu0 0.0
  %343 = vmatprep.subr.mxu0 0.0
  %344 = vmatpush2.msra.mxu0 0.0
  %345 = vmatprep.subr.mxu0 0.0
  %346 = vmatpush2.msra.mxu0 0.0
  %347 = vmatprep.subr.mxu0 0.0
  %348 = vmatpush2.msra.mxu0 0.0
  %349 = vmatprep.subr.mxu0 0.0
  %350 = vmatpush2.msra.mxu0 0.0
  %351 = vmatprep.subr.mxu0 0.0
  %352 = vmatpush2.msra.mxu0 0.0
  %353 = vmatprep.subr.mxu0 0.0
  %354 = vmatpush2.msra.mxu0 0.0
  %355 = vmatprep.subr.mxu0 0.0
  %356 = vmatpush2.msra.mxu0 0.0
  %357 = vmatprep.subr.mxu0 0.0
  %358 = vmatpush2.msra.mxu0 0.0
  %359 = vmatprep.mubr.f32.mxu0 0.0
  %360 = vmatmul.mubr.f32.gmra.mxu0 %v293
  %v361 = vpop.f32.mrf.mxu0
  %v362 = vadd.f32 0.0, %v361
  %v363 = vpop.f32.mrf.mxu0
  %364 = vdwg.mxu0
  %v365 = vadd.f32 %v190, %v268
  %v366 = vadd.f32 %v195, %v269
  %v367 = vadd.f32 %v200, %v270
  %v368 = vadd.f32 %v205, %v271
  %v369 = vadd.f32 %v210, %v272
  %v370 = vadd.f32 %v215, %v273
  %v371 = vadd.f32 %v220, %v274
  %v372 = vadd.f32 %v225, %v275
  %v374 = vsel %vm291, %v362, 0
  %v377 = vsel %vm291, %v365, 0
  %v380 = vsel %vm291, %v366, 0
  %v383 = vsel %vm291, %v367, 0
  %v386 = vsel %vm291, %v368, 0
  %v389 = vsel %vm291, %v369, 0
  %v392 = vsel %vm291, %v370, 0
  %v395 = vsel %vm291, %v371, 0
  %v398 = vsel %vm291, %v372, 0
  %400 = vmatprep.subr.mxu0 0.0
  %401 = vmatpush1.xpose.msra.mxu0 0.0
  %402 = vmatprep.subr.mxu0 0.0
  %403 = vmatpush1.xpose.msra.mxu0 0.0
  %404 = vmatprep.subr.mxu0 0.0
  %405 = vmatpush1.xpose.msra.mxu0 0.0
  %406 = vmatprep.subr.mxu0 0.0
  %407 = vmatpush1.xpose.msra.mxu0 0.0
  %408 = vmatprep.subr.mxu0 0.0
  %409 = vmatpush1.xpose.msra.mxu0 0.0
  %410 = vmatprep.subr.mxu0 0.0
  %411 = vmatpush1.xpose.msra.mxu0 0.0
  %412 = vmatprep.subr.mxu0 0.0
  %413 = vmatpush1.xpose.msra.mxu0 0.0
  %414 = vmatprep.subr.mxu0 0.0
  %415 = vmatpush1.xpose.msra.mxu0 0.0
  %416 = vmatprep.subr.mxu0 0.0
  %417 = vmatpush1.xpose.msra.mxu0 %v398
  %418 = vmatprep.subr.mxu0 0.0
  %419 = vmatpush1.xpose.msra.mxu0 %v395
  %420 = vmatprep.subr.mxu0 0.0
  %421 = vmatpush1.xpose.msra.mxu0 %v392
  %422 = vmatprep.subr.mxu0 0.0
  %423 = vmatpush1.xpose.msra.mxu0 %v389
  %424 = vmatprep.subr.mxu0 0.0
  %425 = vmatpush1.xpose.msra.mxu0 %v386
  %426 = vmatprep.subr.mxu0 0.0
  %427 = vmatpush1.xpose.msra.mxu0 %v383
  %428 = vmatprep.subr.mxu0 0.0
  %429 = vmatpush1.xpose.msra.mxu0 %v380
  %430 = vmatprep.subr.mxu0 0.0
  %431 = vmatpush1.xpose.msra.mxu0 %v377
  %432 = vmatprep.subr.mxu0 0.0
  %433 = vmatpush2.xpose.msra.mxu0 0.0
  %434 = vmatprep.subr.mxu0 0.0
  %435 = vmatpush2.xpose.msra.mxu0 0.0
  %436 = vmatprep.subr.mxu0 0.0
  %437 = vmatpush2.xpose.msra.mxu0 0.0
  %438 = vmatprep.subr.mxu0 0.0
  %439 = vmatpush2.xpose.msra.mxu0 0.0
  %440 = vmatprep.subr.mxu0 0.0
  %441 = vmatpush2.xpose.msra.mxu0 0.0
  %442 = vmatprep.subr.mxu0 0.0
  %443 = vmatpush2.xpose.msra.mxu0 0.0
  %444 = vmatprep.subr.mxu0 0.0
  %445 = vmatpush2.xpose.msra.mxu0 0.0
  %446 = vmatprep.subr.mxu0 0.0
  %447 = vmatpush2.xpose.msra.mxu0 0.0
  %448 = vmatprep.subr.mxu0 0.0
  %449 = vmatpush2.xpose.msra.mxu0 0.0
  %450 = vmatprep.subr.mxu0 0.0
  %451 = vmatpush2.xpose.msra.mxu0 0.0
  %452 = vmatprep.subr.mxu0 0.0
  %453 = vmatpush2.xpose.msra.mxu0 0.0
  %454 = vmatprep.subr.mxu0 0.0
  %455 = vmatpush2.xpose.msra.mxu0 0.0
  %456 = vmatprep.subr.mxu0 0.0
  %457 = vmatpush2.xpose.msra.mxu0 0.0
  %458 = vmatprep.subr.mxu0 0.0
  %459 = vmatpush2.xpose.msra.mxu0 0.0
  %460 = vmatprep.subr.mxu0 0.0
  %461 = vmatpush2.xpose.msra.mxu0 0.0
  %462 = vmatprep.subr.mxu0 0.0
  %463 = vmatpush2.xpose.msra.mxu0 0.0
  %464 = vmatprep.mubr.f32.mxu0 0.0
  %465 = vmatmul.mubr.f32.gmra.mxu0 %v374
  %v466 = vpop.f32.mrf.mxu0
  %v467 = vadd.f32 0.0, %v466
  %v468 = vpop.f32.mrf.mxu0
  %469 = vdwg.mxu0
  %v470 = vmul.f32 %v467, 0.17677669
  %v471 = vadd.f32 %v470, %v284
  %vm472 = vcmask 523264
  %v473 = vsel %vm472, %v471, -inf
  %474 = vmax.xlane.f32.xlu0 %v473
  %v475 = vpop.xlane.xlu0 %474
  %v476 = vsub.f32 %v471, %v475
  %v477 = vmul.f32 %v476, 1.442695
  %v478 = vpow.pop %v477
  %v479 = vsel %vm472, %v478, 0.0
  %480 = vadd.xlane.f32.xlu0 %v479
  %v481 = vpop.xlane.xlu0 %480
  %v482 = vrcp.pop %v481
  %v483 = vmul.f32 %v478, %v482
  %v485 = vsel %vm472, %v483, 0
  %487 = vmatprep.subr.mxu0 0.0
  %488 = vmatpush1.msra.mxu0 0.0
  %489 = vmatprep.subr.mxu0 0.0
  %490 = vmatpush1.msra.mxu0 0.0
  %491 = vmatprep.subr.mxu0 0.0
  %492 = vmatpush1.msra.mxu0 0.0
  %493 = vmatprep.subr.mxu0 0.0
  %494 = vmatpush1.msra.mxu0 0.0
  %495 = vmatprep.subr.mxu0 0.0
  %496 = vmatpush1.msra.mxu0 0.0
  %497 = vmatprep.subr.mxu0 0.0
  %498 = vmatpush1.msra.mxu0 0.0
  %499 = vmatprep.subr.mxu0 0.0
  %500 = vmatpush1.msra.mxu0 0.0
  %501 = vmatprep.subr.mxu0 0.0
  %502 = vmatpush1.msra.mxu0 0.0
  %503 = vmatprep.subr.mxu0 0.0
  %504 = vmatpush1.msra.mxu0 %v225
  %505 = vmatprep.subr.mxu0 0.0
  %506 = vmatpush1.msra.mxu0 %v220
  %507 = vmatprep.subr.mxu0 0.0
  %508 = vmatpush1.msra.mxu0 %v215
  %509 = vmatprep.subr.mxu0 0.0
  %510 = vmatpush1.msra.mxu0 %v210
  %511 = vmatprep.subr.mxu0 0.0
  %512 = vmatpush1.msra.mxu0 %v205
  %513 = vmatprep.subr.mxu0 0.0
  %514 = vmatpush1.msra.mxu0 %v200
  %515 = vmatprep.subr.mxu0 0.0
  %516 = vmatpush1.msra.mxu0 %v195
  %517 = vmatprep.subr.mxu0 0.0
  %518 = vmatpush1.msra.mxu0 %v190
  %519 = vmatprep.subr.mxu0 0.0
  %520 = vmatpush2.msra.mxu0 0.0
  %521 = vmatprep.subr.mxu0 0.0
  %522 = vmatpush2.msra.mxu0 0.0
  %523 = vmatprep.subr.mxu0 0.0
  %524 = vmatpush2.msra.mxu0 0.0
  %525 = vmatprep.subr.mxu0 0.0
  %526 = vmatpush2.msra.mxu0 0.0
  %527 = vmatprep.subr.mxu0 0.0
  %528 = vmatpush2.msra.mxu0 0.0
  %529 = vmatprep.subr.mxu0 0.0
  %530 = vmatpush2.msra.mxu0 0.0
  %531 = vmatprep.subr.mxu0 0.0
  %532 = vmatpush2.msra.mxu0 0.0
  %533 = vmatprep.subr.mxu0 0.0
  %534 = vmatpush2.msra.mxu0 0.0
  %535 = vmatprep.subr.mxu0 0.0
  %536 = vmatpush2.msra.mxu0 0.0
  %537 = vmatprep.subr.mxu0 0.0
  %538 = vmatpush2.msra.mxu0 0.0
  %539 = vmatprep.subr.mxu0 0.0
  %540 = vmatpush2.msra.mxu0 0.0
  %541 = vmatprep.subr.mxu0 0.0
  %542 = vmatpush2.msra.mxu0 0.0
  %543 = vmatprep.subr.mxu0 0.0
  %544 = vmatpush2.msra.mxu0 0.0
  %545 = vmatprep.subr.mxu0 0.0
  %546 = vmatpush2.msra.mxu0 0.0
  %547 = vmatprep.subr.mxu0 0.0
  %548 = vmatpush2.msra.mxu0 0.0
  %549 = vmatprep.subr.mxu0 0.0
  %550 = vmatpush2.msra.mxu0 0.0
  %551 = vmatprep.mubr.f32.mxu0 0.0
  %552 = vmatmul.mubr.f32.gmra.mxu0 %v485
  %v553 = vpop.f32.mrf.mxu0
  %v554 = vadd.f32 0.0, %v553
  %v555 = vpop.f32.mrf.mxu0
  %556 = vdwg.mxu0
  %557 = vst.msk [vmem:[#allocation2] sm:$0xff] %vm291, %v554
  %v558 = vadd.f32 %v230, %v276
  %v559 = vadd.f32 %v235, %v277
  %v560 = vadd.f32 %v240, %v278
  %v561 = vadd.f32 %v245, %v279
  %v562 = vadd.f32 %v250, %v280
  %v563 = vadd.f32 %v255, %v281
  %v564 = vadd.f32 %v260, %v282
  %v565 = vadd.f32 %v265, %v283
  %v567 = vsel %vm291, %v558, 0
  %v570 = vsel %vm291, %v559, 0
  %v573 = vsel %vm291, %v560, 0
  %v576 = vsel %vm291, %v561, 0
  %v579 = vsel %vm291, %v562, 0
  %v582 = vsel %vm291, %v563, 0
  %v585 = vsel %vm291, %v564, 0
  %v588 = vsel %vm291, %v565, 0
  %590 = vmatprep.subr.mxu0 0.0
  %591 = vmatpush1.xpose.msra.mxu0 0.0
  %592 = vmatprep.subr.mxu0 0.0
  %593 = vmatpush1.xpose.msra.mxu0 0.0
  %594 = vmatprep.subr.mxu0 0.0
  %595 = vmatpush1.xpose.msra.mxu0 0.0
  %596 = vmatprep.subr.mxu0 0.0
  %597 = vmatpush1.xpose.msra.mxu0 0.0
  %598 = vmatprep.subr.mxu0 0.0
  %599 = vmatpush1.xpose.msra.mxu0 0.0
  %600 = vmatprep.subr.mxu0 0.0
  %601 = vmatpush1.xpose.msra.mxu0 0.0
  %602 = vmatprep.subr.mxu0 0.0
  %603 = vmatpush1.xpose.msra.mxu0 0.0
  %604 = vmatprep.subr.mxu0 0.0
  %605 = vmatpush1.xpose.msra.mxu0 0.0
  %606 = vmatprep.subr.mxu0 0.0
  %607 = vmatpush1.xpose.msra.mxu0 %v588
  %608 = vmatprep.subr.mxu0 0.0
  %609 = vmatpush1.xpose.msra.mxu0 %v585
  %610 = vmatprep.subr.mxu0 0.0
  %611 = vmatpush1.xpose.msra.mxu0 %v582
  %612 = vmatprep.subr.mxu0 0.0
  %613 = vmatpush1.xpose.msra.mxu0 %v579
  %614 = vmatprep.subr.mxu0 0.0
  %615 = vmatpush1.xpose.msra.mxu0 %v576
  %616 = vmatprep.subr.mxu0 0.0
  %617 = vmatpush1.xpose.msra.mxu0 %v573
  %618 = vmatprep.subr.mxu0 0.0
  %619 = vmatpush1.xpose.msra.mxu0 %v570
  %620 = vmatprep.subr.mxu0 0.0
  %621 = vmatpush1.xpose.msra.mxu0 %v567
  %622 = vmatprep.subr.mxu0 0.0
  %623 = vmatpush2.xpose.msra.mxu0 0.0
  %624 = vmatprep.subr.mxu0 0.0
  %625 = vmatpush2.xpose.msra.mxu0 0.0
  %626 = vmatprep.subr.mxu0 0.0
  %627 = vmatpush2.xpose.msra.mxu0 0.0
  %628 = vmatprep.subr.mxu0 0.0
  %629 = vmatpush2.xpose.msra.mxu0 0.0
  %630 = vmatprep.subr.mxu0 0.0
  %631 = vmatpush2.xpose.msra.mxu0 0.0
  %632 = vmatprep.subr.mxu0 0.0
  %633 = vmatpush2.xpose.msra.mxu0 0.0
  %634 = vmatprep.subr.mxu0 0.0
  %635 = vmatpush2.xpose.msra.mxu0 0.0
  %636 = vmatprep.subr.mxu0 0.0
  %637 = vmatpush2.xpose.msra.mxu0 0.0
  %638 = vmatprep.subr.mxu0 0.0
  %639 = vmatpush2.xpose.msra.mxu0 0.0
  %640 = vmatprep.subr.mxu0 0.0
  %641 = vmatpush2.xpose.msra.mxu0 0.0
  %642 = vmatprep.subr.mxu0 0.0
  %643 = vmatpush2.xpose.msra.mxu0 0.0
  %644 = vmatprep.subr.mxu0 0.0
  %645 = vmatpush2.xpose.msra.mxu0 0.0
  %646 = vmatprep.subr.mxu0 0.0
  %647 = vmatpush2.xpose.msra.mxu0 0.0
  %648 = vmatprep.subr.mxu0 0.0
  %649 = vmatpush2.xpose.msra.mxu0 0.0
  %650 = vmatprep.subr.mxu0 0.0
  %651 = vmatpush2.xpose.msra.mxu0 0.0
  %652 = vmatprep.subr.mxu0 0.0
  %653 = vmatpush2.xpose.msra.mxu0 0.0
  %654 = vmatprep.mubr.f32.mxu0 0.0
  %655 = vmatmul.mubr.f32.gmra.mxu0 %v374
  %v656 = vpop.f32.mrf.mxu0
  %v657 = vadd.f32 0.0, %v656
  %v658 = vpop.f32.mrf.mxu0
  %659 = vdwg.mxu0
  %v660 = vmul.f32 %v657, 0.17677669
  %v661 = vadd.f32 %v660, %v285
  %v662 = vsel %vm472, %v661, -inf
  %663 = vmax.xlane.f32.xlu0 %v662
  %v664 = vpop.xlane.xlu0 %663
  %v665 = vsub.f32 %v661, %v664
  %v666 = vmul.f32 %v665, 1.442695
  %v667 = vpow.pop %v666
  %v668 = vsel %vm472, %v667, 0.0
  %669 = vadd.xlane.f32.xlu0 %v668
  %v670 = vpop.xlane.xlu0 %669
  %v671 = vrcp.pop %v670
  %v672 = vmul.f32 %v667, %v671
  %v674 = vsel %vm472, %v672, 0
  %676 = vmatprep.subr.mxu0 0.0
  %677 = vmatpush1.msra.mxu0 0.0
  %678 = vmatprep.subr.mxu0 0.0
  %679 = vmatpush1.msra.mxu0 0.0
  %680 = vmatprep.subr.mxu0 0.0
  %681 = vmatpush1.msra.mxu0 0.0
  %682 = vmatprep.subr.mxu0 0.0
  %683 = vmatpush1.msra.mxu0 0.0
  %684 = vmatprep.subr.mxu0 0.0
  %685 = vmatpush1.msra.mxu0 0.0
  %686 = vmatprep.subr.mxu0 0.0
  %687 = vmatpush1.msra.mxu0 0.0
  %688 = vmatprep.subr.mxu0 0.0
  %689 = vmatpush1.msra.mxu0 0.0
  %690 = vmatprep.subr.mxu0 0.0
  %691 = vmatpush1.msra.mxu0 0.0
  %692 = vmatprep.subr.mxu0 0.0
  %693 = vmatpush1.msra.mxu0 %v265
  %694 = vmatprep.subr.mxu0 0.0
  %695 = vmatpush1.msra.mxu0 %v260
  %696 = vmatprep.subr.mxu0 0.0
  %697 = vmatpush1.msra.mxu0 %v255
  %698 = vmatprep.subr.mxu0 0.0
  %699 = vmatpush1.msra.mxu0 %v250
  %700 = vmatprep.subr.mxu0 0.0
  %701 = vmatpush1.msra.mxu0 %v245
  %702 = vmatprep.subr.mxu0 0.0
  %703 = vmatpush1.msra.mxu0 %v240
  %704 = vmatprep.subr.mxu0 0.0
  %705 = vmatpush1.msra.mxu0 %v235
  %706 = vmatprep.subr.mxu0 0.0
  %707 = vmatpush1.msra.mxu0 %v230
  %708 = vmatprep.subr.mxu0 0.0
  %709 = vmatpush2.msra.mxu0 0.0
  %710 = vmatprep.subr.mxu0 0.0
  %711 = vmatpush2.msra.mxu0 0.0
  %712 = vmatprep.subr.mxu0 0.0
  %713 = vmatpush2.msra.mxu0 0.0
  %714 = vmatprep.subr.mxu0 0.0
  %715 = vmatpush2.msra.mxu0 0.0
  %716 = vmatprep.subr.mxu0 0.0
  %717 = vmatpush2.msra.mxu0 0.0
  %718 = vmatprep.subr.mxu0 0.0
  %719 = vmatpush2.msra.mxu0 0.0
  %720 = vmatprep.subr.mxu0 0.0
  %721 = vmatpush2.msra.mxu0 0.0
  %722 = vmatprep.subr.mxu0 0.0
  %723 = vmatpush2.msra.mxu0 0.0
  %724 = vmatprep.subr.mxu0 0.0
  %725 = vmatpush2.msra.mxu0 0.0
  %726 = vmatprep.subr.mxu0 0.0
  %727 = vmatpush2.msra.mxu0 0.0
  %728 = vmatprep.subr.mxu0 0.0
  %729 = vmatpush2.msra.mxu0 0.0
  %730 = vmatprep.subr.mxu0 0.0
  %731 = vmatpush2.msra.mxu0 0.0
  %732 = vmatprep.subr.mxu0 0.0
  %733 = vmatpush2.msra.mxu0 0.0
  %734 = vmatprep.subr.mxu0 0.0
  %735 = vmatpush2.msra.mxu0 0.0
  %736 = vmatprep.subr.mxu0 0.0
  %737 = vmatpush2.msra.mxu0 0.0
  %738 = vmatprep.subr.mxu0 0.0
  %739 = vmatpush2.msra.mxu0 0.0
  %740 = vmatprep.mubr.f32.mxu0 0.0
  %741 = vmatmul.mubr.f32.gmra.mxu0 %v674
  %v742 = vpop.f32.mrf.mxu0
  %v743 = vadd.f32 0.0, %v742
  %v744 = vpop.f32.mrf.mxu0
  %745 = vdwg.mxu0
  %746 = vst.msk [vmem:[#allocation2 + $0x8] sm:$0xff] %vm291, %v743
  %747 = vrot.lane.b32.xlu0 %v362, 96
  %v748 = vpop.permute.xlu0 %747
  %v749 = vsel %vm291, %v748, 0
  %751 = vmatprep.subr.mxu0 0.0
  %752 = vmatpush1.xpose.msra.mxu0 0.0
  %753 = vmatprep.subr.mxu0 0.0
  %754 = vmatpush1.xpose.msra.mxu0 0.0
  %755 = vmatprep.subr.mxu0 0.0
  %756 = vmatpush1.xpose.msra.mxu0 0.0
  %757 = vmatprep.subr.mxu0 0.0
  %758 = vmatpush1.xpose.msra.mxu0 0.0
  %759 = vmatprep.subr.mxu0 0.0
  %760 = vmatpush1.xpose.msra.mxu0 0.0
  %761 = vmatprep.subr.mxu0 0.0
  %762 = vmatpush1.xpose.msra.mxu0 0.0
  %763 = vmatprep.subr.mxu0 0.0
  %764 = vmatpush1.xpose.msra.mxu0 0.0
  %765 = vmatprep.subr.mxu0 0.0
  %766 = vmatpush1.xpose.msra.mxu0 0.0
  %767 = vmatprep.subr.mxu0 0.0
  %768 = vmatpush1.xpose.msra.mxu0 %v398
  %769 = vmatprep.subr.mxu0 0.0
  %770 = vmatpush1.xpose.msra.mxu0 %v395
  %771 = vmatprep.subr.mxu0 0.0
  %772 = vmatpush1.xpose.msra.mxu0 %v392
  %773 = vmatprep.subr.mxu0 0.0
  %774 = vmatpush1.xpose.msra.mxu0 %v389
  %775 = vmatprep.subr.mxu0 0.0
  %776 = vmatpush1.xpose.msra.mxu0 %v386
  %777 = vmatprep.subr.mxu0 0.0
  %778 = vmatpush1.xpose.msra.mxu0 %v383
  %779 = vmatprep.subr.mxu0 0.0
  %780 = vmatpush1.xpose.msra.mxu0 %v380
  %781 = vmatprep.subr.mxu0 0.0
  %782 = vmatpush1.xpose.msra.mxu0 %v377
  %783 = vmatprep.subr.mxu0 0.0
  %784 = vmatpush2.xpose.msra.mxu0 0.0
  %785 = vmatprep.subr.mxu0 0.0
  %786 = vmatpush2.xpose.msra.mxu0 0.0
  %787 = vmatprep.subr.mxu0 0.0
  %788 = vmatpush2.xpose.msra.mxu0 0.0
  %789 = vmatprep.subr.mxu0 0.0
  %790 = vmatpush2.xpose.msra.mxu0 0.0
  %791 = vmatprep.subr.mxu0 0.0
  %792 = vmatpush2.xpose.msra.mxu0 0.0
  %793 = vmatprep.subr.mxu0 0.0
  %794 = vmatpush2.xpose.msra.mxu0 0.0
  %795 = vmatprep.subr.mxu0 0.0
  %796 = vmatpush2.xpose.msra.mxu0 0.0
  %797 = vmatprep.subr.mxu0 0.0
  %798 = vmatpush2.xpose.msra.mxu0 0.0
  %799 = vmatprep.subr.mxu0 0.0
  %800 = vmatpush2.xpose.msra.mxu0 0.0
  %801 = vmatprep.subr.mxu0 0.0
  %802 = vmatpush2.xpose.msra.mxu0 0.0
  %803 = vmatprep.subr.mxu0 0.0
  %804 = vmatpush2.xpose.msra.mxu0 0.0
  %805 = vmatprep.subr.mxu0 0.0
  %806 = vmatpush2.xpose.msra.mxu0 0.0
  %807 = vmatprep.subr.mxu0 0.0
  %808 = vmatpush2.xpose.msra.mxu0 0.0
  %809 = vmatprep.subr.mxu0 0.0
  %810 = vmatpush2.xpose.msra.mxu0 0.0
  %811 = vmatprep.subr.mxu0 0.0
  %812 = vmatpush2.xpose.msra.mxu0 0.0
  %813 = vmatprep.subr.mxu0 0.0
  %814 = vmatpush2.xpose.msra.mxu0 0.0
  %815 = vmatprep.mubr.f32.mxu0 0.0
  %816 = vmatmul.mubr.f32.gmra.mxu0 %v749
  %v817 = vpop.f32.mrf.mxu0
  %v818 = vadd.f32 0.0, %v817
  %v819 = vpop.f32.mrf.mxu0
  %820 = vdwg.mxu0
  %v821 = vmul.f32 %v818, 0.17677669
  %v822 = vadd.f32 %v821, %v284
  %v823 = vsel %vm472, %v822, -inf
  %824 = vmax.xlane.f32.xlu0 %v823
  %v825 = vpop.xlane.xlu0 %824
  %v826 = vsub.f32 %v822, %v825
  %v827 = vmul.f32 %v826, 1.442695
  %v828 = vpow.pop %v827
  %v829 = vsel %vm472, %v828, 0.0
  %830 = vadd.xlane.f32.xlu0 %v829
  %v831 = vpop.xlane.xlu0 %830
  %v832 = vrcp.pop %v831
  %v833 = vmul.f32 %v828, %v832
  %v835 = vsel %vm472, %v833, 0
  %837 = vmatprep.subr.mxu0 0.0
  %838 = vmatpush1.msra.mxu0 0.0
  %839 = vmatprep.subr.mxu0 0.0
  %840 = vmatpush1.msra.mxu0 0.0
  %841 = vmatprep.subr.mxu0 0.0
  %842 = vmatpush1.msra.mxu0 0.0
  %843 = vmatprep.subr.mxu0 0.0
  %844 = vmatpush1.msra.mxu0 0.0
  %845 = vmatprep.subr.mxu0 0.0
  %846 = vmatpush1.msra.mxu0 0.0
  %847 = vmatprep.subr.mxu0 0.0
  %848 = vmatpush1.msra.mxu0 0.0
  %849 = vmatprep.subr.mxu0 0.0
  %850 = vmatpush1.msra.mxu0 0.0
  %851 = vmatprep.subr.mxu0 0.0
  %852 = vmatpush1.msra.mxu0 0.0
  %853 = vmatprep.subr.mxu0 0.0
  %854 = vmatpush1.msra.mxu0 %v225
  %855 = vmatprep.subr.mxu0 0.0
  %856 = vmatpush1.msra.mxu0 %v220
  %857 = vmatprep.subr.mxu0 0.0
  %858 = vmatpush1.msra.mxu0 %v215
  %859 = vmatprep.subr.mxu0 0.0
  %860 = vmatpush1.msra.mxu0 %v210
  %861 = vmatprep.subr.mxu0 0.0
  %862 = vmatpush1.msra.mxu0 %v205
  %863 = vmatprep.subr.mxu0 0.0
  %864 = vmatpush1.msra.mxu0 %v200
  %865 = vmatprep.subr.mxu0 0.0
  %866 = vmatpush1.msra.mxu0 %v195
  %867 = vmatprep.subr.mxu0 0.0
  %868 = vmatpush1.msra.mxu0 %v190
  %869 = vmatprep.subr.mxu0 0.0
  %870 = vmatpush2.msra.mxu0 0.0
  %871 = vmatprep.subr.mxu0 0.0
  %872 = vmatpush2.msra.mxu0 0.0
  %873 = vmatprep.subr.mxu0 0.0
  %874 = vmatpush2.msra.mxu0 0.0
  %875 = vmatprep.subr.mxu0 0.0
  %876 = vmatpush2.msra.mxu0 0.0
  %877 = vmatprep.subr.mxu0 0.0
  %878 = vmatpush2.msra.mxu0 0.0
  %879 = vmatprep.subr.mxu0 0.0
  %880 = vmatpush2.msra.mxu0 0.0
  %881 = vmatprep.subr.mxu0 0.0
  %882 = vmatpush2.msra.mxu0 0.0
  %883 = vmatprep.subr.mxu0 0.0
  %884 = vmatpush2.msra.mxu0 0.0
  %885 = vmatprep.subr.mxu0 0.0
  %886 = vmatpush2.msra.mxu0 0.0
  %887 = vmatprep.subr.mxu0 0.0
  %888 = vmatpush2.msra.mxu0 0.0
  %889 = vmatprep.subr.mxu0 0.0
  %890 = vmatpush2.msra.mxu0 0.0
  %891 = vmatprep.subr.mxu0 0.0
  %892 = vmatpush2.msra.mxu0 0.0
  %893 = vmatprep.subr.mxu0 0.0
  %894 = vmatpush2.msra.mxu0 0.0
  %895 = vmatprep.subr.mxu0 0.0
  %896 = vmatpush2.msra.mxu0 0.0
  %897 = vmatprep.subr.mxu0 0.0
  %898 = vmatpush2.msra.mxu0 0.0
  %899 = vmatprep.subr.mxu0 0.0
  %900 = vmatpush2.msra.mxu0 0.0
  %901 = vmatprep.mubr.f32.mxu0 0.0
  %902 = vmatmul.mubr.f32.gmra.mxu0 %v835
  %v903 = vpop.f32.mrf.mxu0
  %v904 = vadd.f32 0.0, %v903
  %v905 = vpop.f32.mrf.mxu0
  %906 = vdwg.mxu0
  %907 = vst.msk [vmem:[#allocation2 + $0x10] sm:$0xff] %vm291, %v904
  %908 = vmatprep.subr.mxu0 0.0
  %909 = vmatpush1.xpose.msra.mxu0 0.0
  %910 = vmatprep.subr.mxu0 0.0
  %911 = vmatpush1.xpose.msra.mxu0 0.0
  %912 = vmatprep.subr.mxu0 0.0
  %913 = vmatpush1.xpose.msra.mxu0 0.0
  %914 = vmatprep.subr.mxu0 0.0
  %915 = vmatpush1.xpose.msra.mxu0 0.0
  %916 = vmatprep.subr.mxu0 0.0
  %917 = vmatpush1.xpose.msra.mxu0 0.0
  %918 = vmatprep.subr.mxu0 0.0
  %919 = vmatpush1.xpose.msra.mxu0 0.0
  %920 = vmatprep.subr.mxu0 0.0
  %921 = vmatpush1.xpose.msra.mxu0 0.0
  %922 = vmatprep.subr.mxu0 0.0
  %923 = vmatpush1.xpose.msra.mxu0 0.0
  %924 = vmatprep.subr.mxu0 0.0
  %925 = vmatpush1.xpose.msra.mxu0 %v588
  %926 = vmatprep.subr.mxu0 0.0
  %927 = vmatpush1.xpose.msra.mxu0 %v585
  %928 = vmatprep.subr.mxu0 0.0
  %929 = vmatpush1.xpose.msra.mxu0 %v582
  %930 = vmatprep.subr.mxu0 0.0
  %931 = vmatpush1.xpose.msra.mxu0 %v579
  %932 = vmatprep.subr.mxu0 0.0
  %933 = vmatpush1.xpose.msra.mxu0 %v576
  %934 = vmatprep.subr.mxu0 0.0
  %935 = vmatpush1.xpose.msra.mxu0 %v573
  %936 = vmatprep.subr.mxu0 0.0
  %937 = vmatpush1.xpose.msra.mxu0 %v570
  %938 = vmatprep.subr.mxu0 0.0
  %939 = vmatpush1.xpose.msra.mxu0 %v567
  %940 = vmatprep.subr.mxu0 0.0
  %941 = vmatpush2.xpose.msra.mxu0 0.0
  %942 = vmatprep.subr.mxu0 0.0
  %943 = vmatpush2.xpose.msra.mxu0 0.0
  %944 = vmatprep.subr.mxu0 0.0
  %945 = vmatpush2.xpose.msra.mxu0 0.0
  %946 = vmatprep.subr.mxu0 0.0
  %947 = vmatpush2.xpose.msra.mxu0 0.0
  %948 = vmatprep.subr.mxu0 0.0
  %949 = vmatpush2.xpose.msra.mxu0 0.0
  %950 = vmatprep.subr.mxu0 0.0
  %951 = vmatpush2.xpose.msra.mxu0 0.0
  %952 = vmatprep.subr.mxu0 0.0
  %953 = vmatpush2.xpose.msra.mxu0 0.0
  %954 = vmatprep.subr.mxu0 0.0
  %955 = vmatpush2.xpose.msra.mxu0 0.0
  %956 = vmatprep.subr.mxu0 0.0
  %957 = vmatpush2.xpose.msra.mxu0 0.0
  %958 = vmatprep.subr.mxu0 0.0
  %959 = vmatpush2.xpose.msra.mxu0 0.0
  %960 = vmatprep.subr.mxu0 0.0
  %961 = vmatpush2.xpose.msra.mxu0 0.0
  %962 = vmatprep.subr.mxu0 0.0
  %963 = vmatpush2.xpose.msra.mxu0 0.0
  %964 = vmatprep.subr.mxu0 0.0
  %965 = vmatpush2.xpose.msra.mxu0 0.0
  %966 = vmatprep.subr.mxu0 0.0
  %967 = vmatpush2.xpose.msra.mxu0 0.0
  %968 = vmatprep.subr.mxu0 0.0
  %969 = vmatpush2.xpose.msra.mxu0 0.0
  %970 = vmatprep.subr.mxu0 0.0
  %971 = vmatpush2.xpose.msra.mxu0 0.0
  %972 = vmatprep.mubr.f32.mxu0 0.0
  %973 = vmatmul.mubr.f32.gmra.mxu0 %v749
  %v974 = vpop.f32.mrf.mxu0
  %v975 = vadd.f32 0.0, %v974
  %v976 = vpop.f32.mrf.mxu0
  %977 = vdwg.mxu0
  %v978 = vmul.f32 %v975, 0.17677669
  %v979 = vadd.f32 %v978, %v285
  %v980 = vsel %vm472, %v979, -inf
  %981 = vmax.xlane.f32.xlu0 %v980
  %v982 = vpop.xlane.xlu0 %981
  %v983 = vsub.f32 %v979, %v982
  %v984 = vmul.f32 %v983, 1.442695
  %v985 = vpow.pop %v984
  %v986 = vsel %vm472, %v985, 0.0
  %987 = vadd.xlane.f32.xlu0 %v986
  %v988 = vpop.xlane.xlu0 %987
  %v989 = vrcp.pop %v988
  %v990 = vmul.f32 %v985, %v989
  %v992 = vsel %vm472, %v990, 0
  %994 = vmatprep.subr.mxu0 0.0
  %995 = vmatpush1.msra.mxu0 0.0
  %996 = vmatprep.subr.mxu0 0.0
  %997 = vmatpush1.msra.mxu0 0.0
  %998 = vmatprep.subr.mxu0 0.0
  %999 = vmatpush1.msra.mxu0 0.0
  %1000 = vmatprep.subr.mxu0 0.0
  %1001 = vmatpush1.msra.mxu0 0.0
  %1002 = vmatprep.subr.mxu0 0.0
  %1003 = vmatpush1.msra.mxu0 0.0
  %1004 = vmatprep.subr.mxu0 0.0
  %1005 = vmatpush1.msra.mxu0 0.0
  %1006 = vmatprep.subr.mxu0 0.0
  %1007 = vmatpush1.msra.mxu0 0.0
  %1008 = vmatprep.subr.mxu0 0.0
  %1009 = vmatpush1.msra.mxu0 0.0
  %1010 = vmatprep.subr.mxu0 0.0
  %1011 = vmatpush1.msra.mxu0 %v265
  %1012 = vmatprep.subr.mxu0 0.0
  %1013 = vmatpush1.msra.mxu0 %v260
  %1014 = vmatprep.subr.mxu0 0.0
  %1015 = vmatpush1.msra.mxu0 %v255
  %1016 = vmatprep.subr.mxu0 0.0
  %1017 = vmatpush1.msra.mxu0 %v250
  %1018 = vmatprep.subr.mxu0 0.0
  %1019 = vmatpush1.msra.mxu0 %v245
  %1020 = vmatprep.subr.mxu0 0.0
  %1021 = vmatpush1.msra.mxu0 %v240
  %1022 = vmatprep.subr.mxu0 0.0
  %1023 = vmatpush1.msra.mxu0 %v235
  %1024 = vmatprep.subr.mxu0 0.0
  %1025 = vmatpush1.msra.mxu0 %v230
  %1026 = vmatprep.subr.mxu0 0.0
  %1027 = vmatpush2.msra.mxu0 0.0
  %1028 = vmatprep.subr.mxu0 0.0
  %1029 = vmatpush2.msra.mxu0 0.0
  %1030 = vmatprep.subr.mxu0 0.0
  %1031 = vmatpush2.msra.mxu0 0.0
  %1032 = vmatprep.subr.mxu0 0.0
  %1033 = vmatpush2.msra.mxu0 0.0
  %1034 = vmatprep.subr.mxu0 0.0
  %1035 = vmatpush2.msra.mxu0 0.0
  %1036 = vmatprep.subr.mxu0 0.0
  %1037 = vmatpush2.msra.mxu0 0.0
  %1038 = vmatprep.subr.mxu0 0.0
  %1039 = vmatpush2.msra.mxu0 0.0
  %1040 = vmatprep.subr.mxu0 0.0
  %1041 = vmatpush2.msra.mxu0 0.0
  %1042 = vmatprep.subr.mxu0 0.0
  %1043 = vmatpush2.msra.mxu0 0.0
  %1044 = vmatprep.subr.mxu0 0.0
  %1045 = vmatpush2.msra.mxu0 0.0
  %1046 = vmatprep.subr.mxu0 0.0
  %1047 = vmatpush2.msra.mxu0 0.0
  %1048 = vmatprep.subr.mxu0 0.0
  %1049 = vmatpush2.msra.mxu0 0.0
  %1050 = vmatprep.subr.mxu0 0.0
  %1051 = vmatpush2.msra.mxu0 0.0
  %1052 = vmatprep.subr.mxu0 0.0
  %1053 = vmatpush2.msra.mxu0 0.0
  %1054 = vmatprep.subr.mxu0 0.0
  %1055 = vmatpush2.msra.mxu0 0.0
  %1056 = vmatprep.subr.mxu0 0.0
  %1057 = vmatpush2.msra.mxu0 0.0
  %1058 = vmatprep.mubr.f32.mxu0 0.0
  %1059 = vmatmul.mubr.f32.gmra.mxu0 %v992
  %v1060 = vpop.f32.mrf.mxu0
  %v1061 = vadd.f32 0.0, %v1060
  %v1062 = vpop.f32.mrf.mxu0
  %1063 = vdwg.mxu0
  %1064 = vst.msk [vmem:[#allocation2 + $0x18] sm:$0xff] %vm291, %v1061
  %v1065 = vld [vmem:[#allocation2] sm:$0xff]
  %v1066 = vld [vmem:[#allocation2 + $0x8] sm:$0xff]
  %v1067 = vld [vmem:[#allocation2 + $0x10] sm:$0xff]
  %v1068 = vld [vmem:[#allocation2 + $0x18] sm:$0xff]
  %v1069 = vld [vmem:[%s7] sm:$0xff]
  %v1070 = vld [vmem:[%s7 + $0x8] sm:$0xff]
  %v1071 = vld [vmem:[%s7 + $0x10] sm:$0xff]
  %v1072 = vld [vmem:[%s7 + $0x18] sm:$0xff]
  %v1073 = vld [vmem:[%s8] sm:$0x1]
  %v1075 = vlaneseq
  %v1076 = vshrl.u32 %v1075, 7
  %v1077 = vsub.s32 0, %v1076
  %v1078 = vrot.slane %v1073, %v1077
  %v1081 = vsel %vm291, %v1065, 0
  %v1084 = vsel %vm291, %v1066, 0
  %v1087 = vsel %vm291, %v1067, 0
  %v1090 = vsel %vm291, %v1068, 0
  %1092 = vmatprep.subr.mxu0 0.0
  %1093 = vmatpush1.msra.mxu0 0.0
  %1094 = vmatprep.subr.mxu0 0.0
  %1095 = vmatpush1.msra.mxu0 0.0
  %1096 = vmatprep.subr.mxu0 0.0
  %1097 = vmatpush1.msra.mxu0 0.0
  %1098 = vmatprep.subr.mxu0 0.0
  %1099 = vmatpush1.msra.mxu0 0.0
  %1100 = vmatprep.subr.mxu0 0.0
  %1101 = vmatpush1.msra.mxu0 0.0
  %1102 = vmatprep.subr.mxu0 0.0
  %1103 = vmatpush1.msra.mxu0 0.0
  %1104 = vmatprep.subr.mxu0 0.0
  %1105 = vmatpush1.msra.mxu0 0.0
  %1106 = vmatprep.subr.mxu0 0.0
  %1107 = vmatpush1.msra.mxu0 0.0
  %1108 = vmatprep.subr.mxu0 0.0
  %1109 = vmatpush1.msra.mxu0 0.0
  %1110 = vmatprep.subr.mxu0 0.0
  %1111 = vmatpush1.msra.mxu0 0.0
  %1112 = vmatprep.subr.mxu0 0.0
  %1113 = vmatpush1.msra.mxu0 0.0
  %1114 = vmatprep.subr.mxu0 0.0
  %1115 = vmatpush1.msra.mxu0 0.0
  %1116 = vmatprep.subr.mxu0 0.0
  %1117 = vmatpush1.msra.mxu0 %v1072
  %1118 = vmatprep.subr.mxu0 0.0
  %1119 = vmatpush1.msra.mxu0 %v1071
  %1120 = vmatprep.subr.mxu0 0.0
  %1121 = vmatpush1.msra.mxu0 %v1070
  %1122 = vmatprep.subr.mxu0 0.0
  %1123 = vmatpush1.msra.mxu0 %v1069
  %1124 = vmatprep.subr.mxu0 0.0
  %1125 = vmatpush2.msra.mxu0 0.0
  %1126 = vmatprep.subr.mxu0 0.0
  %1127 = vmatpush2.msra.mxu0 0.0
  %1128 = vmatprep.subr.mxu0 0.0
  %1129 = vmatpush2.msra.mxu0 0.0
  %1130 = vmatprep.subr.mxu0 0.0
  %1131 = vmatpush2.msra.mxu0 0.0
  %1132 = vmatprep.subr.mxu0 0.0
  %1133 = vmatpush2.msra.mxu0 0.0
  %1134 = vmatprep.subr.mxu0 0.0
  %1135 = vmatpush2.msra.mxu0 0.0
  %1136 = vmatprep.subr.mxu0 0.0
  %1137 = vmatpush2.msra.mxu0 0.0
  %1138 = vmatprep.subr.mxu0 0.0
  %1139 = vmatpush2.msra.mxu0 0.0
  %1140 = vmatprep.subr.mxu0 0.0
  %1141 = vmatpush2.msra.mxu0 0.0
  %1142 = vmatprep.subr.mxu0 0.0
  %1143 = vmatpush2.msra.mxu0 0.0
  %1144 = vmatprep.subr.mxu0 0.0
  %1145 = vmatpush2.msra.mxu0 0.0
  %1146 = vmatprep.subr.mxu0 0.0
  %1147 = vmatpush2.msra.mxu0 0.0
  %1148 = vmatprep.subr.mxu0 0.0
  %1149 = vmatpush2.msra.mxu0 0.0
  %1150 = vmatprep.subr.mxu0 0.0
  %1151 = vmatpush2.msra.mxu0 0.0
  %1152 = vmatprep.subr.mxu0 0.0
  %1153 = vmatpush2.msra.mxu0 0.0
  %1154 = vmatprep.subr.mxu0 0.0
  %1155 = vmatpush2.msra.mxu0 0.0
  %1156 = vmatprep.mubr.f32.mxu0 0.0
  %1157 = vmatmul.mubr.f32.gmra.mxu0 %v1081
  %v1158 = vpop.f32.mrf.mxu0
  %v1159 = vadd.f32 %v1078, %v1158
  %v1160 = vpop.f32.mrf.mxu0
  %1161 = vmatprep.mubr.f32.mxu0 0.0
  %1162 = vmatmul.mubr.f32.gmra.mxu0 %v1084
  %v1163 = vpop.f32.mrf.mxu0
  %v1164 = vadd.f32 %v1078, %v1163
  %v1165 = vpop.f32.mrf.mxu0
  %1166 = vmatprep.mubr.f32.mxu0 0.0
  %1167 = vmatmul.mubr.f32.gmra.mxu0 %v1087
  %v1168 = vpop.f32.mrf.mxu0
  %v1169 = vadd.f32 %v1078, %v1168
  %v1170 = vpop.f32.mrf.mxu0
  %1171 = vmatprep.mubr.f32.mxu0 0.0
  %1172 = vmatmul.mubr.f32.gmra.mxu0 %v1090
  %v1173 = vpop.f32.mrf.mxu0
  %v1174 = vadd.f32 %v1078, %v1173
  %v1175 = vpop.f32.mrf.mxu0
  %1176 = vdwg.mxu0
  %vm1177 = vcmask 48128
  %1178 = vst.msk [vmem:[%s13] sm:$0xff] %vm1177, %v1159
  %1179 = vst.msk [vmem:[%s13 + $0x8] sm:$0xff] %vm1177, %v1164
  %1180 = vst.msk [vmem:[%s13 + $0x10] sm:$0xff] %vm1177, %v1169
  %1181 = vst.msk [vmem:[%s13 + $0x18] sm:$0xff] %vm1177, %v1174
  %v1182 = vmax.f32 %v1159, 0.0
  %v1183 = vmax.f32 %v1164, 0.0
  %v1184 = vmax.f32 %v1169, 0.0
  %v1185 = vmax.f32 %v1174, 0.0
  %v1186 = vld [vmem:[%s9] sm:$0xff]
  %v1187 = vld [vmem:[%s9 + $0x8] sm:$0xff]
  %v1188 = vld [vmem:[%s9 + $0x10] sm:$0xff]
  %v1189 = vld [vmem:[%s9 + $0x18] sm:$0xff]
  %v1190 = vld [vmem:[%s10] sm:$0x1]
  %v1192 = vlaneseq
  %v1193 = vshrl.u32 %v1192, 7
  %v1194 = vsub.s32 0, %v1193
  %v1195 = vrot.slane %v1190, %v1194
  %1201 = vrot.lane.b32.xlu0 %v1182, 122
  %v1202 = vpop.permute.xlu0 %1201
  %1203 = vrot.lane.b32.xlu0 %v1183, 122
  %v1204 = vpop.permute.xlu0 %1203
  %1205 = vrot.lane.b32.xlu0 %v1184, 122
  %v1206 = vpop.permute.xlu0 %1205
  %1207 = vrot.lane.b32.xlu0 %v1185, 122
  %v1208 = vpop.permute.xlu0 %1207
  %v1209 = vsel %vm291, %v1202, 0
  %v1211 = vsel %vm291, %v1204, 0
  %v1213 = vsel %vm291, %v1206, 0
  %v1215 = vsel %vm291, %v1208, 0
  %1217 = vmatprep.subr.mxu0 0.0
  %1218 = vmatpush1.msra.mxu0 0.0
  %1219 = vmatprep.subr.mxu0 0.0
  %1220 = vmatpush1.msra.mxu0 0.0
  %1221 = vmatprep.subr.mxu0 0.0
  %1222 = vmatpush1.msra.mxu0 0.0
  %1223 = vmatprep.subr.mxu0 0.0
  %1224 = vmatpush1.msra.mxu0 0.0
  %1225 = vmatprep.subr.mxu0 0.0
  %1226 = vmatpush1.msra.mxu0 0.0
  %1227 = vmatprep.subr.mxu0 0.0
  %1228 = vmatpush1.msra.mxu0 0.0
  %1229 = vmatprep.subr.mxu0 0.0
  %1230 = vmatpush1.msra.mxu0 0.0
  %1231 = vmatprep.subr.mxu0 0.0
  %1232 = vmatpush1.msra.mxu0 0.0
  %1233 = vmatprep.subr.mxu0 0.0
  %1234 = vmatpush1.msra.mxu0 0.0
  %1235 = vmatprep.subr.mxu0 0.0
  %1236 = vmatpush1.msra.mxu0 0.0
  %1237 = vmatprep.subr.mxu0 0.0
  %1238 = vmatpush1.msra.mxu0 0.0
  %1239 = vmatprep.subr.mxu0 0.0
  %1240 = vmatpush1.msra.mxu0 0.0
  %1241 = vmatprep.subr.mxu0 0.0
  %1242 = vmatpush1.msra.mxu0 %v1189
  %1243 = vmatprep.subr.mxu0 0.0
  %1244 = vmatpush1.msra.mxu0 %v1188
  %1245 = vmatprep.subr.mxu0 0.0
  %1246 = vmatpush1.msra.mxu0 %v1187
  %1247 = vmatprep.subr.mxu0 0.0
  %1248 = vmatpush1.msra.mxu0 %v1186
  %1249 = vmatprep.subr.mxu0 0.0
  %1250 = vmatpush2.msra.mxu0 0.0
  %1251 = vmatprep.subr.mxu0 0.0
  %1252 = vmatpush2.msra.mxu0 0.0
  %1253 = vmatprep.subr.mxu0 0.0
  %1254 = vmatpush2.msra.mxu0 0.0
  %1255 = vmatprep.subr.mxu0 0.0
  %1256 = vmatpush2.msra.mxu0 0.0
  %1257 = vmatprep.subr.mxu0 0.0
  %1258 = vmatpush2.msra.mxu0 0.0
  %1259 = vmatprep.subr.mxu0 0.0
  %1260 = vmatpush2.msra.mxu0 0.0
  %1261 = vmatprep.subr.mxu0 0.0
  %1262 = vmatpush2.msra.mxu0 0.0
  %1263 = vmatprep.subr.mxu0 0.0
  %1264 = vmatpush2.msra.mxu0 0.0
  %1265 = vmatprep.subr.mxu0 0.0
  %1266 = vmatpush2.msra.mxu0 0.0
  %1267 = vmatprep.subr.mxu0 0.0
  %1268 = vmatpush2.msra.mxu0 0.0
  %1269 = vmatprep.subr.mxu0 0.0
  %1270 = vmatpush2.msra.mxu0 0.0
  %1271 = vmatprep.subr.mxu0 0.0
  %1272 = vmatpush2.msra.mxu0 0.0
  %1273 = vmatprep.subr.mxu0 0.0
  %1274 = vmatpush2.msra.mxu0 0.0
  %1275 = vmatprep.subr.mxu0 0.0
  %1276 = vmatpush2.msra.mxu0 0.0
  %1277 = vmatprep.subr.mxu0 0.0
  %1278 = vmatpush2.msra.mxu0 0.0
  %1279 = vmatprep.subr.mxu0 0.0
  %1280 = vmatpush2.msra.mxu0 0.0
  %1281 = vmatprep.mubr.f32.mxu0 0.0
  %1282 = vmatmul.mubr.f32.gmra.mxu0 %v1209
  %v1283 = vpop.f32.mrf.mxu0
  %v1284 = vadd.f32 %v1195, %v1283
  %v1285 = vpop.f32.mrf.mxu0
  %1286 = vmatprep.mubr.f32.mxu0 0.0
  %1287 = vmatmul.mubr.f32.gmra.mxu0 %v1211
  %v1288 = vpop.f32.mrf.mxu0
  %v1289 = vadd.f32 %v1195, %v1288
  %v1290 = vpop.f32.mrf.mxu0
  %1291 = vmatprep.mubr.f32.mxu0 0.0
  %1292 = vmatmul.mubr.f32.gmra.mxu0 %v1213
  %v1293 = vpop.f32.mrf.mxu0
  %v1294 = vadd.f32 %v1195, %v1293
  %v1295 = vpop.f32.mrf.mxu0
  %1296 = vmatprep.mubr.f32.mxu0 0.0
  %1297 = vmatmul.mubr.f32.gmra.mxu0 %v1215
  %v1298 = vpop.f32.mrf.mxu0
  %v1299 = vadd.f32 %v1195, %v1298
  %v1300 = vpop.f32.mrf.mxu0
  %1301 = vdwg.mxu0
  %v1302 = vmax.f32 %v1284, 0.0
  %v1303 = vmax.f32 %v1289, 0.0
  %v1304 = vmax.f32 %v1294, 0.0
  %v1305 = vmax.f32 %v1299, 0.0
  %v1306 = vld [vmem:[%s11] sm:$0xff]
  %v1307 = vld [vmem:[%s11 + $0x8] sm:$0xff]
  %v1308 = vld [vmem:[%s11 + $0x10] sm:$0xff]
  %v1309 = vld [vmem:[%s11 + $0x18] sm:$0xff]
  %v1310 = vld [vmem:[%s12] sm:$0x1]
  %v1312 = vlaneseq
  %v1313 = vshrl.u32 %v1312, 7
  %v1314 = vsub.s32 0, %v1313
  %v1315 = vrot.slane %v1310, %v1314
  %v1318 = vsel %vm291, %v1302, 0
  %v1321 = vsel %vm291, %v1303, 0
  %v1324 = vsel %vm291, %v1304, 0
  %v1327 = vsel %vm291, %v1305, 0
  %1329 = vmatprep.subr.mxu0 0.0
  %1330 = vmatpush1.msra.mxu0 0.0
  %1331 = vmatprep.subr.mxu0 0.0
  %1332 = vmatpush1.msra.mxu0 0.0
  %1333 = vmatprep.subr.mxu0 0.0
  %1334 = vmatpush1.msra.mxu0 0.0
  %1335 = vmatprep.subr.mxu0 0.0
  %1336 = vmatpush1.msra.mxu0 0.0
  %1337 = vmatprep.subr.mxu0 0.0
  %1338 = vmatpush1.msra.mxu0 0.0
  %1339 = vmatprep.subr.mxu0 0.0
  %1340 = vmatpush1.msra.mxu0 0.0
  %1341 = vmatprep.subr.mxu0 0.0
  %1342 = vmatpush1.msra.mxu0 0.0
  %1343 = vmatprep.subr.mxu0 0.0
  %1344 = vmatpush1.msra.mxu0 0.0
  %1345 = vmatprep.subr.mxu0 0.0
  %1346 = vmatpush1.msra.mxu0 0.0
  %1347 = vmatprep.subr.mxu0 0.0
  %1348 = vmatpush1.msra.mxu0 0.0
  %1349 = vmatprep.subr.mxu0 0.0
  %1350 = vmatpush1.msra.mxu0 0.0
  %1351 = vmatprep.subr.mxu0 0.0
  %1352 = vmatpush1.msra.mxu0 0.0
  %1353 = vmatprep.subr.mxu0 0.0
  %1354 = vmatpush1.msra.mxu0 %v1309
  %1355 = vmatprep.subr.mxu0 0.0
  %1356 = vmatpush1.msra.mxu0 %v1308
  %1357 = vmatprep.subr.mxu0 0.0
  %1358 = vmatpush1.msra.mxu0 %v1307
  %1359 = vmatprep.subr.mxu0 0.0
  %1360 = vmatpush1.msra.mxu0 %v1306
  %1361 = vmatprep.subr.mxu0 0.0
  %1362 = vmatpush2.msra.mxu0 0.0
  %1363 = vmatprep.subr.mxu0 0.0
  %1364 = vmatpush2.msra.mxu0 0.0
  %1365 = vmatprep.subr.mxu0 0.0
  %1366 = vmatpush2.msra.mxu0 0.0
  %1367 = vmatprep.subr.mxu0 0.0
  %1368 = vmatpush2.msra.mxu0 0.0
  %1369 = vmatprep.subr.mxu0 0.0
  %1370 = vmatpush2.msra.mxu0 0.0
  %1371 = vmatprep.subr.mxu0 0.0
  %1372 = vmatpush2.msra.mxu0 0.0
  %1373 = vmatprep.subr.mxu0 0.0
  %1374 = vmatpush2.msra.mxu0 0.0
  %1375 = vmatprep.subr.mxu0 0.0
  %1376 = vmatpush2.msra.mxu0 0.0
  %1377 = vmatprep.subr.mxu0 0.0
  %1378 = vmatpush2.msra.mxu0 0.0
  %1379 = vmatprep.subr.mxu0 0.0
  %1380 = vmatpush2.msra.mxu0 0.0
  %1381 = vmatprep.subr.mxu0 0.0
  %1382 = vmatpush2.msra.mxu0 0.0
  %1383 = vmatprep.subr.mxu0 0.0
  %1384 = vmatpush2.msra.mxu0 0.0
  %1385 = vmatprep.subr.mxu0 0.0
  %1386 = vmatpush2.msra.mxu0 0.0
  %1387 = vmatprep.subr.mxu0 0.0
  %1388 = vmatpush2.msra.mxu0 0.0
  %1389 = vmatprep.subr.mxu0 0.0
  %1390 = vmatpush2.msra.mxu0 0.0
  %1391 = vmatprep.subr.mxu0 0.0
  %1392 = vmatpush2.msra.mxu0 0.0
  %1393 = vmatprep.mubr.f32.mxu0 0.0
  %1394 = vmatmul.mubr.f32.gmra.mxu0 %v1318
  %v1395 = vpop.f32.mrf.mxu0
  %v1396 = vadd.f32 %v1315, %v1395
  %v1397 = vpop.f32.mrf.mxu0
  %1398 = vmatprep.mubr.f32.mxu0 0.0
  %1399 = vmatmul.mubr.f32.gmra.mxu0 %v1321
  %v1400 = vpop.f32.mrf.mxu0
  %v1401 = vadd.f32 %v1315, %v1400
  %v1402 = vpop.f32.mrf.mxu0
  %1403 = vmatprep.mubr.f32.mxu0 0.0
  %1404 = vmatmul.mubr.f32.gmra.mxu0 %v1324
  %v1405 = vpop.f32.mrf.mxu0
  %v1406 = vadd.f32 %v1315, %v1405
  %v1407 = vpop.f32.mrf.mxu0
  %1408 = vmatprep.mubr.f32.mxu0 0.0
  %1409 = vmatmul.mubr.f32.gmra.mxu0 %v1327
  %v1410 = vpop.f32.mrf.mxu0
  %v1411 = vadd.f32 %v1315, %v1410
  %v1412 = vpop.f32.mrf.mxu0
  %1413 = vdwg.mxu0
  %v1414 = vxor.u32 %v1396, 2147483648
  %v1415 = vxor.u32 %v1401, 2147483648
  %v1416 = vxor.u32 %v1406, 2147483648
  %v1417 = vxor.u32 %v1411, 2147483648
  %v1418 = vmul.f32 %v1414, 1.442695
  %v1419 = vpow.pop %v1418
  %v1420 = vmul.f32 %v1415, 1.442695
  %v1421 = vpow.pop %v1420
  %v1422 = vmul.f32 %v1416, 1.442695
  %v1423 = vpow.pop %v1422
  %v1424 = vmul.f32 %v1417, 1.442695
  %v1425 = vpow.pop %v1424
  %v1426 = vadd.f32 %v1419, 1.0
  %v1427 = vadd.f32 %v1421, 1.0
  %v1428 = vadd.f32 %v1423, 1.0
  %v1429 = vadd.f32 %v1425, 1.0
  %v1430 = vrcp.pop %v1426
  %v1431 = vmul.f32 1.0, %v1430
  %v1432 = vrcp.pop %v1427
  %v1433 = vmul.f32 1.0, %v1432
  %v1434 = vrcp.pop %v1428
  %v1435 = vmul.f32 1.0, %v1434
  %v1436 = vrcp.pop %v1429
  %v1437 = vmul.f32 1.0, %v1436
  %vm1438 = vcmask 31744
  %1439 = vst.msk [vmem:[%s14] sm:$0xff] %vm1438, %v1431
  %1440 = vst.msk [vmem:[%s14 + $0x8] sm:$0xff] %vm1438, %v1433
  %1441 = vst.msk [vmem:[%s14 + $0x10] sm:$0xff] %vm1438, %v1435
  %1442 = vst.msk [vmem:[%s14 + $0x18] sm:$0xff] %vm1438, %v1437
  // Predicated region
  $region54: #{_lambda_.1} parent=0 // pred_check
    _
  $region55: #{_lambda_.1} parent=0 // pred_check_branch
    %1444 = sbr.rel (0) target = $region57
  $region56: #{_lambda_.1} parent=0 // pred_region
    _
  $region57: #{_lambda_.1} parent=0 // pred_fallthru
    _
  // Predicated region
  $region58: #{_lambda_.1} parent=0 // pred_check
    _
  $region59: #{_lambda_.1} parent=0 // pred_check_branch
    %1446 = sbr.rel (0) target = $region61
  $region60: #{_lambda_.1} parent=0 // pred_region
    _
  $region61: #{_lambda_.1} parent=0 // pred_fallthru
    _
  // Predicated region
  $region62: #{_lambda_.1} parent=0 // pred_check
    _
  $region63: #{_lambda_.1} parent=0 // pred_check_branch
    %1448 = sbr.rel (0) target = $region65
  $region64: #{_lambda_.1} parent=0 // pred_region
    _
  $region65: #{_lambda_.1} parent=0 // pred_fallthru
    _
  // Predicated region
  $region66: #{_lambda_.1} parent=0 // pred_check
    _
  $region67: #{_lambda_.1} parent=0 // pred_check_branch
    %1450 = sbr.rel (0) target = $region69
  $region68: #{_lambda_.1} parent=0 // pred_region
    _
  $region69: #{_lambda_.1} parent=0 // pred_fallthru
    _

</llo_original>
